<compile_context>
chip_gen: v7x
topology: tpu7x:2x2x1
jax: 0.10.0
libtpu: 0.0.40
codegen_flags: <defaults>
</compile_context>

<pallas_src>
import functools

import jax
import jax.numpy as jnp
from jax.experimental import pallas as pl
from jax.experimental.pallas import tpu as pltpu

# Module hyper-parameters (defaults of the PyTorch module).
INPUT_DIM = 512          # per-branch input features
HID_TEXT = 512           # fc1_text out
HID_IMAGE = 256          # fc1_image out
OUTPUT_DIM = 256         # fc2_* out

# Fixed tile buckets: avoids a fresh compile for every distinct batch size.
_TILE_BUCKETS = (8, 64, 256, 512, 1024)


def _pick_tile(B, tm, min_tile):
    """Pick a batch tile from the fixed bucket set.

    For non-trivial batches aim for >= 2 grid steps so the ("parallel",) batch
    axis can be sharded across v7x's two TensorCores instead of collapsing to a
    single giant tile.
    """
    want = -(-B // 2) if B > 128 else B          # ceil(B/2) once B is "medium"
    want = max(want, min_tile)
    tile = next((t for t in _TILE_BUCKETS if t >= want), _TILE_BUCKETS[-1])
    return max(min(tile, tm), min_tile)


def _projection_kernel(x_ref,
                       w1t_ref, b1t_ref, w2t_ref, b2t_ref,
                       w1i_ref, b1i_ref, w2i_ref, b2i_ref,
                       o_ref):
    """One batch-tile of the full forward pass (both branches + sum)."""
    cdt = w1t_ref.dtype                         # MXU compute dtype (bf16 or f32)
    x = x_ref[...]                              # (tile, 2*INPUT_DIM), one DMA
    xt = x[:, :INPUT_DIM].astype(cdt)           # lane-aligned static slice (free)
    xi = x[:, INPUT_DIM:].astype(cdt)

    # --- text branch: relu(fc1_text) -> relu(fc2_text) ---
    t = jnp.dot(xt, w1t_ref[...], preferred_element_type=jnp.float32)
    t = jnp.maximum(t + b1t_ref[...], 0.0)      # f32 bias/ReLU epilogue (VPU)
    t = jnp.dot(t.astype(cdt), w2t_ref[...], preferred_element_type=jnp.float32)
    t = jnp.maximum(t + b2t_ref[...], 0.0)

    # --- image branch: relu(fc1_image) -> relu(fc2_image) ---
    im = jnp.dot(xi, w1i_ref[...], preferred_element_type=jnp.float32)
    im = jnp.maximum(im + b1i_ref[...], 0.0)
    im = jnp.dot(im.astype(cdt), w2i_ref[...], preferred_element_type=jnp.float32)
    im = jnp.maximum(im + b2i_ref[...], 0.0)

    o_ref[...] = (t + im).astype(o_ref.dtype)


@functools.partial(jax.jit, static_argnames=("tile", "out_dtype"))
def _forward(x, prepared, *, tile, out_dtype):
    """x: [B, 2*INPUT_DIM]; no wrapper padding — Pallas masks the tail block."""
    B = x.shape[0]
    grid = (pl.cdiv(B, tile),)

    def full2d(a):
        # Whole-array block, grid-invariant (fetched once, stays VMEM-resident).
        return pl.BlockSpec(a.shape, lambda i: (0, 0))

    weight_bytes = sum(int(v.size) * v.dtype.itemsize for v in prepared.values())
    out_itemsize = jnp.dtype(out_dtype).itemsize
    flops = 2 * B * (INPUT_DIM * HID_TEXT + HID_TEXT * OUTPUT_DIM +
                     INPUT_DIM * HID_IMAGE + HID_IMAGE * OUTPUT_DIM)
    bytes_accessed = (x.size * x.dtype.itemsize + weight_bytes
                      + B * OUTPUT_DIM * out_itemsize)

    # Right-size the VMEM reservation from the actual per-step footprint
    # (x tile + out tile double-buffered, weights, f32 activation temporaries).
    vmem_bytes = int(
        2 * tile * 2 * INPUT_DIM * x.dtype.itemsize
        + 2 * tile * OUTPUT_DIM * out_itemsize
        + 2 * weight_bytes
        + tile * (2 * INPUT_DIM + HID_TEXT + HID_IMAGE + 2 * OUTPUT_DIM) * 4
        + (4 << 20))                           # headroom for compiler scratch
    vmem_bytes = max(vmem_bytes, 16 << 20)

    return pl.pallas_call(
        _projection_kernel,
        out_shape=jax.ShapeDtypeStruct((B, OUTPUT_DIM), out_dtype),
        grid_spec=pltpu.PrefetchScalarGridSpec(
            num_scalar_prefetch=0,
            grid=grid,
            in_specs=[
                # One contiguous (tile, 1024) DMA; split in-kernel at lane 512.
                pl.BlockSpec((tile, 2 * INPUT_DIM), lambda i: (i, 0)),
                full2d(prepared["w1t"]), full2d(prepared["b1t"]),
                full2d(prepared["w2t"]), full2d(prepared["b2t"]),
                full2d(prepared["w1i"]), full2d(prepared["b1i"]),
                full2d(prepared["w2i"]), full2d(prepared["b2i"]),
            ],
            out_specs=pl.BlockSpec((tile, OUTPUT_DIM), lambda i: (i, 0)),
        ),
        compiler_params=pltpu.CompilerParams(
            dimension_semantics=("parallel",),      # batch axis -> v7x megacore
            vmem_limit_bytes=vmem_bytes,
        ),
        cost_estimate=pl.CostEstimate(
            flops=flops, transcendentals=0, bytes_accessed=bytes_accessed),
    )(x,
      prepared["w1t"], prepared["b1t"], prepared["w2t"], prepared["b2t"],
      prepared["w1i"], prepared["b1i"], prepared["w2i"], prepared["b2i"])


def projection_head_forward(x, prepared, *, tm=512, out_dtype=jnp.float32):
    """x: [B, 2*INPUT_DIM] (f32 or bf16).  Returns [B, OUTPUT_DIM] out_dtype."""
    B, D = x.shape
    assert D == 2 * INPUT_DIM
    # bf16 inputs need 16-row sublane packing; int8/fp8 would need 32.
    min_tile = 8 if x.dtype.itemsize >= 4 else (16 if x.dtype.itemsize == 2 else 32)
    tile = _pick_tile(B, tm, min_tile)
    return _forward(x, prepared, tile=tile, out_dtype=out_dtype)


def prepare_params(params, compute_dtype=jnp.bfloat16):
    """One-time (outside jit) repack of PyTorch-convention params:
    weights [out,in] -> [in,out] in the MXU compute dtype; biases [out] -> [1,out]
    kept in f32 for the f32 VPU epilogue."""
    f32 = jnp.float32
    return {
        "w1t": params["fc1_text_w"].T.astype(compute_dtype),    # (512, 512)
        "b1t": params["fc1_text_b"][None, :].astype(f32),       # (1, 512)
        "w2t": params["fc2_text_w"].T.astype(compute_dtype),    # (512, 256)
        "b2t": params["fc2_text_b"][None, :].astype(f32),       # (1, 256)
        "w1i": params["fc1_image_w"].T.astype(compute_dtype),   # (512, 256)
        "b1i": params["fc1_image_b"][None, :].astype(f32),      # (1, 256)
        "w2i": params["fc2_image_w"].T.astype(compute_dtype),   # (256, 256)
        "b2i": params["fc2_image_b"][None, :].astype(f32),      # (1, 256)
    }


def init_params(key):
    """Deterministic synthetic parameters with the module's shapes
    (PyTorch nn.Linear convention: weight [out, in], bias [out])."""
    ks = jax.random.split(key, 8)
    s = 0.02
    return {
        "fc1_text_w": s * jax.random.normal(ks[0], (HID_TEXT, INPUT_DIM), jnp.float32),
        "fc1_text_b": s * jax.random.normal(ks[1], (HID_TEXT,), jnp.float32),
        "fc2_text_w": s * jax.random.normal(ks[2], (OUTPUT_DIM, HID_TEXT), jnp.float32),
        "fc2_text_b": s * jax.random.normal(ks[3], (OUTPUT_DIM,), jnp.float32),
        "fc1_image_w": s * jax.random.normal(ks[4], (HID_IMAGE, INPUT_DIM), jnp.float32),
        "fc1_image_b": s * jax.random.normal(ks[5], (HID_IMAGE,), jnp.float32),
        "fc2_image_w": s * jax.random.normal(ks[6], (OUTPUT_DIM, HID_IMAGE), jnp.float32),
        "fc2_image_b": s * jax.random.normal(ks[7], (OUTPUT_DIM,), jnp.float32),
    }


def reference_forward(x, p):
    """Pure-JAX reference matching the PyTorch forward exactly (f32)."""
    xt, xi = x[:, :INPUT_DIM], x[:, INPUT_DIM:]
    t = jax.nn.relu(xt @ p["fc1_text_w"].T + p["fc1_text_b"])
    t = jax.nn.relu(t @ p["fc2_text_w"].T + p["fc2_text_b"])
    im = jax.nn.relu(xi @ p["fc1_image_w"].T + p["fc1_image_b"])
    im = jax.nn.relu(im @ p["fc2_image_w"].T + p["fc2_image_b"])
    return t + im


if __name__ == "__main__":
    key = jax.random.PRNGKey(0)
    k_params, k_x1, k_x2 = jax.random.split(key, 3)

    params = init_params(k_params)
    prep_f32 = prepare_params(params, compute_dtype=jnp.float32)
    prep_bf16 = prepare_params(params, compute_dtype=jnp.bfloat16)

    # Case 1: small, non-multiple-of-8 batch -> single partial (masked) block.
    B1 = 6
    x1 = jax.random.normal(k_x1, (B1, 2 * INPUT_DIM), jnp.float32)
    ref1 = reference_forward(x1, params)

    out1_f32 = jax.block_until_ready(projection_head_forward(x1, prep_f32))
    assert out1_f32.shape == (B1, OUTPUT_DIM)
    assert jnp.allclose(out1_f32, ref1, atol=1e-4, rtol=1e-4), "f32 mismatch (B=6)"

    out1_bf16 = jax.block_until_ready(projection_head_forward(x1, prep_bf16))
    assert jnp.allclose(out1_bf16, ref1, atol=3e-2, rtol=3e-2), "bf16 mismatch (B=6)"

    # Case 2: medium batch -> grid of 2 steps with a ragged tail block
    # (exercises the no-pad masked-tail path and the multi-step pipeline).
    B2 = 300
    x2 = jax.random.normal(k_x2, (B2, 2 * INPUT_DIM), jnp.float32)
    ref2 = reference_forward(x2, params)

    out2_f32 = jax.block_until_ready(projection_head_forward(x2, prep_f32))
    assert out2_f32.shape == (B2, OUTPUT_DIM)
    assert jnp.allclose(out2_f32, ref2, atol=1e-4, rtol=1e-4), "f32 mismatch (B=300)"

    out2_bf16 = jax.block_until_ready(projection_head_forward(x2, prep_bf16))
    assert jnp.allclose(out2_bf16, ref2, atol=3e-2, rtol=3e-2), "bf16 mismatch (B=300)"

    print("KERNEL_OK")
</pallas_src>

<mosaic_0001>
module attributes {stable_mosaic.version = 11 : i64} {
  func.func @_projection_kernel(%arg0: i32, %arg1: memref<8x1024xf32, #tpu.memory_space<vmem>>, %arg2: memref<512x512xf32, #tpu.memory_space<vmem>>, %arg3: memref<1x512xf32, #tpu.memory_space<vmem>>, %arg4: memref<512x256xf32, #tpu.memory_space<vmem>>, %arg5: memref<1x256xf32, #tpu.memory_space<vmem>>, %arg6: memref<512x256xf32, #tpu.memory_space<vmem>>, %arg7: memref<1x256xf32, #tpu.memory_space<vmem>>, %arg8: memref<256x256xf32, #tpu.memory_space<vmem>>, %arg9: memref<1x256xf32, #tpu.memory_space<vmem>>, %arg10: memref<8x256xf32, #tpu.memory_space<vmem>>) attributes {dimension_semantics = [#tpu.dimension_semantics<parallel>], iteration_bounds = array<i64: 1>, scalar_prefetch = 0 : i64, scratch_operands = 0 : i64, tpu.core_type = #tpu.core_type<tc>, window_params = [{transform_indices = @transform_0, window_bounds = array<i64: 8, 1024>}, {pipeline_mode = #tpu.pipeline_mode<synchronous>, transform_indices = @transform_1, window_bounds = array<i64: 512, 512>}, {pipeline_mode = #tpu.pipeline_mode<synchronous>, transform_indices = @transform_2, window_bounds = array<i64: 1, 512>}, {pipeline_mode = #tpu.pipeline_mode<synchronous>, transform_indices = @transform_3, window_bounds = array<i64: 512, 256>}, {pipeline_mode = #tpu.pipeline_mode<synchronous>, transform_indices = @transform_4, window_bounds = array<i64: 1, 256>}, {pipeline_mode = #tpu.pipeline_mode<synchronous>, transform_indices = @transform_5, window_bounds = array<i64: 512, 256>}, {pipeline_mode = #tpu.pipeline_mode<synchronous>, transform_indices = @transform_6, window_bounds = array<i64: 1, 256>}, {pipeline_mode = #tpu.pipeline_mode<synchronous>, transform_indices = @transform_7, window_bounds = array<i64: 256, 256>}, {pipeline_mode = #tpu.pipeline_mode<synchronous>, transform_indices = @transform_8, window_bounds = array<i64: 1, 256>}, {transform_indices = @transform_9, window_bounds = array<i64: 8, 256>}]} {
    %c0 = arith.constant 0 : index
    %c0_0 = arith.constant 0 : index
    %0 = vector.load %arg1[%c0, %c0_0] : memref<8x1024xf32, #tpu.memory_space<vmem>>, vector<8x1024xf32>
    %1 = vector.extract_strided_slice %0 {offsets = [0, 0], sizes = [8, 512], strides = [1, 1]} : vector<8x1024xf32> to vector<8x512xf32>
    %2 = vector.extract_strided_slice %0 {offsets = [0, 512], sizes = [8, 512], strides = [1, 1]} : vector<8x1024xf32> to vector<8x512xf32>
    %c0_1 = arith.constant 0 : index
    %c0_2 = arith.constant 0 : index
    %3 = vector.load %arg2[%c0_1, %c0_2] : memref<512x512xf32, #tpu.memory_space<vmem>>, vector<512x512xf32>
    %cst = arith.constant dense<0.000000e+00> : vector<8x512xf32>
    %4 = tpu.matmul %1, %3, %cst {dimension_numbers = #tpu.dot_dimension_numbers<[1], [0], [0], [1], [0, 0, 1, 1], [], []>} : vector<8x512xf32>, vector<512x512xf32>, vector<8x512xf32> -> vector<8x512xf32>
    %c0_3 = arith.constant 0 : index
    %c0_4 = arith.constant 0 : index
    %5 = vector.load %arg3[%c0_3, %c0_4] : memref<1x512xf32, #tpu.memory_space<vmem>>, vector<1x512xf32>
    %6 = vector.broadcast %5 : vector<1x512xf32> to vector<8x512xf32>
    %7 = arith.addf %4, %6 : vector<8x512xf32>
    %cst_5 = arith.constant 0.000000e+00 : f32
    %8 = vector.broadcast %cst_5 : f32 to vector<8x512xf32>
    %9 = arith.maximumf %7, %8 : vector<8x512xf32>
    %c0_6 = arith.constant 0 : index
    %c0_7 = arith.constant 0 : index
    %10 = vector.load %arg4[%c0_6, %c0_7] : memref<512x256xf32, #tpu.memory_space<vmem>>, vector<512x256xf32>
    %cst_8 = arith.constant dense<0.000000e+00> : vector<8x256xf32>
    %11 = tpu.matmul %9, %10, %cst_8 {dimension_numbers = #tpu.dot_dimension_numbers<[1], [0], [0], [1], [0, 0, 1, 1], [], []>} : vector<8x512xf32>, vector<512x256xf32>, vector<8x256xf32> -> vector<8x256xf32>
    %c0_9 = arith.constant 0 : index
    %c0_10 = arith.constant 0 : index
    %12 = vector.load %arg5[%c0_9, %c0_10] : memref<1x256xf32, #tpu.memory_space<vmem>>, vector<1x256xf32>
    %13 = vector.broadcast %12 : vector<1x256xf32> to vector<8x256xf32>
    %14 = arith.addf %11, %13 : vector<8x256xf32>
    %cst_11 = arith.constant 0.000000e+00 : f32
    %15 = vector.broadcast %cst_11 : f32 to vector<8x256xf32>
    %16 = arith.maximumf %14, %15 : vector<8x256xf32>
    %c0_12 = arith.constant 0 : index
    %c0_13 = arith.constant 0 : index
    %17 = vector.load %arg6[%c0_12, %c0_13] : memref<512x256xf32, #tpu.memory_space<vmem>>, vector<512x256xf32>
    %cst_14 = arith.constant dense<0.000000e+00> : vector<8x256xf32>
    %18 = tpu.matmul %2, %17, %cst_14 {dimension_numbers = #tpu.dot_dimension_numbers<[1], [0], [0], [1], [0, 0, 1, 1], [], []>} : vector<8x512xf32>, vector<512x256xf32>, vector<8x256xf32> -> vector<8x256xf32>
    %c0_15 = arith.constant 0 : index
    %c0_16 = arith.constant 0 : index
    %19 = vector.load %arg7[%c0_15, %c0_16] : memref<1x256xf32, #tpu.memory_space<vmem>>, vector<1x256xf32>
    %20 = vector.broadcast %19 : vector<1x256xf32> to vector<8x256xf32>
    %21 = arith.addf %18, %20 : vector<8x256xf32>
    %cst_17 = arith.constant 0.000000e+00 : f32
    %22 = vector.broadcast %cst_17 : f32 to vector<8x256xf32>
    %23 = arith.maximumf %21, %22 : vector<8x256xf32>
    %c0_18 = arith.constant 0 : index
    %c0_19 = arith.constant 0 : index
    %24 = vector.load %arg8[%c0_18, %c0_19] : memref<256x256xf32, #tpu.memory_space<vmem>>, vector<256x256xf32>
    %cst_20 = arith.constant dense<0.000000e+00> : vector<8x256xf32>
    %25 = tpu.matmul %23, %24, %cst_20 {dimension_numbers = #tpu.dot_dimension_numbers<[1], [0], [0], [1], [0, 0, 1, 1], [], []>} : vector<8x256xf32>, vector<256x256xf32>, vector<8x256xf32> -> vector<8x256xf32>
    %c0_21 = arith.constant 0 : index
    %c0_22 = arith.constant 0 : index
    %26 = vector.load %arg9[%c0_21, %c0_22] : memref<1x256xf32, #tpu.memory_space<vmem>>, vector<1x256xf32>
    %27 = vector.broadcast %26 : vector<1x256xf32> to vector<8x256xf32>
    %28 = arith.addf %25, %27 : vector<8x256xf32>
    %cst_23 = arith.constant 0.000000e+00 : f32
    %29 = vector.broadcast %cst_23 : f32 to vector<8x256xf32>
    %30 = arith.maximumf %28, %29 : vector<8x256xf32>
    %31 = arith.addf %16, %30 : vector<8x256xf32>
    %c0_24 = arith.constant 0 : index
    %c0_25 = arith.constant 0 : index
    %32 = vector.load %arg10[%c0_24, %c0_25] : memref<8x256xf32, #tpu.memory_space<vmem>>, vector<8x256xf32>
    tpu.vector_store %arg10[%c0_24, %c0_25], %31 {strides = array<i32>} : memref<8x256xf32, #tpu.memory_space<vmem>>, vector<8x256xf32>,
    return
  }
  func.func @transform_0(%arg0: i32) -> (i32, i32) {
    %c0_i32 = arith.constant 0 : i32
    %c0_i32_0 = arith.constant 0 : i32
    return %arg0, %c0_i32 : i32, i32
  }
  func.func @transform_1(%arg0: i32) -> (i32, i32) {
    %c0_i32 = arith.constant 0 : i32
    %c0_i32_0 = arith.constant 0 : i32
    %c0_i32_1 = arith.constant 0 : i32
    return %c0_i32, %c0_i32_0 : i32, i32
  }
  func.func @transform_2(%arg0: i32) -> (i32, i32) {
    %c0_i32 = arith.constant 0 : i32
    %c0_i32_0 = arith.constant 0 : i32
    %c0_i32_1 = arith.constant 0 : i32
    return %c0_i32, %c0_i32_0 : i32, i32
  }
  func.func @transform_3(%arg0: i32) -> (i32, i32) {
    %c0_i32 = arith.constant 0 : i32
    %c0_i32_0 = arith.constant 0 : i32
    %c0_i32_1 = arith.constant 0 : i32
    return %c0_i32, %c0_i32_0 : i32, i32
  }
  func.func @transform_4(%arg0: i32) -> (i32, i32) {
    %c0_i32 = arith.constant 0 : i32
    %c0_i32_0 = arith.constant 0 : i32
    %c0_i32_1 = arith.constant 0 : i32
    return %c0_i32, %c0_i32_0 : i32, i32
  }
  func.func @transform_5(%arg0: i32) -> (i32, i32) {
    %c0_i32 = arith.constant 0 : i32
    %c0_i32_0 = arith.constant 0 : i32
    %c0_i32_1 = arith.constant 0 : i32
    return %c0_i32, %c0_i32_0 : i32, i32
  }
  func.func @transform_6(%arg0: i32) -> (i32, i32) {
    %c0_i32 = arith.constant 0 : i32
    %c0_i32_0 = arith.constant 0 : i32
    %c0_i32_1 = arith.constant 0 : i32
    return %c0_i32, %c0_i32_0 : i32, i32
  }
  func.func @transform_7(%arg0: i32) -> (i32, i32) {
    %c0_i32 = arith.constant 0 : i32
    %c0_i32_0 = arith.constant 0 : i32
    %c0_i32_1 = arith.constant 0 : i32
    return %c0_i32, %c0_i32_0 : i32, i32
  }
  func.func @transform_8(%arg0: i32) -> (i32, i32) {
    %c0_i32 = arith.constant 0 : i32
    %c0_i32_0 = arith.constant 0 : i32
    %c0_i32_1 = arith.constant 0 : i32
    return %c0_i32, %c0_i32_0 : i32, i32
  }
  func.func @transform_9(%arg0: i32) -> (i32, i32) {
    %c0_i32 = arith.constant 0 : i32
    %c0_i32_0 = arith.constant 0 : i32
    return %arg0, %c0_i32 : i32, i32
  }
}

</mosaic_0001>

<llo_original>
// kernel: _forward.1
$region0: #{_forward.1}
  #allocation0 [shape = 'u32[]', space=smem, size = 0x4, offset = 0x4, fixed_abs, tag = 'smem constant byte address 0x4 - core index']
  #allocation1 [shape = 'u32[144,128]{1,0:T(1,128)}', space=vmem, size = 0x12000, scoped, tag = 'internal scratch']
  %s0 = inlined_call_operand.hbm [shape: f32[6,1024], index: 0, kind: input, shape index: {}]
  %s1 = inlined_call_operand.hbm [shape: f32[512,512], index: 1, kind: input, shape index: {}]
  %s2 = inlined_call_operand.vmem [shape: f32[1,512], index: 2, kind: input, shape index: {}]
  %s3 = inlined_call_operand.hbm [shape: f32[512,256], index: 3, kind: input, shape index: {}]
  %s4 = inlined_call_operand.vmem [shape: f32[1,256], index: 4, kind: input, shape index: {}]
  %s5 = inlined_call_operand.hbm [shape: f32[512,256], index: 5, kind: input, shape index: {}]
  %s6 = inlined_call_operand.hbm [shape: f32[1,256], index: 6, kind: input, shape index: {}]
  %s7 = inlined_call_operand.hbm [shape: f32[256,256], index: 7, kind: input, shape index: {}]
  %s8 = inlined_call_operand.vmem [shape: f32[1,256], index: 8, kind: input, shape index: {}]
  %s9 = inlined_call_operand.hbm [shape: f32[6,256], index: 9, kind: output, shape index: {}]
  %s10 = sld [smem:[#allocation0]]
  $region70: #{_forward.1} parent=0
    _
  %s12 = ssub.s32 1, %s10
  %s13 = scalar_select 0, %s12, %s10
  $region1: #{_forward.1} parent=0
    #allocation2 [shape = 'u8[32768]{0}', space=vmem, size = 0x8000, scoped, tag = 'input window, operand 0, single buffered']
    #allocation3 [shape = 's32[1]{0}', space=sflag, size = 0x4, scoped, tag = 'scoped memory for _forward.1']
    #allocation4 [shape = 's32[1]{0}', space=sflag, size = 0x4, scoped, tag = 'scoped memory for _forward.1']
    #allocation5 [shape = 'u8[1048576]{0}', space=vmem, size = 0x100000, scoped, tag = 'input window, operand 1, single buffered']
    #allocation6 [shape = 's32[1]{0}', space=sflag, size = 0x4, scoped, tag = 'scoped memory for _forward.1']
    #allocation7 [shape = 'u8[524288]{0}', space=vmem, size = 0x80000, scoped, tag = 'input window, operand 3, single buffered']
    #allocation8 [shape = 'u8[524288]{0}', space=vmem, size = 0x80000, scoped, tag = 'input window, operand 5, single buffered']
    #allocation9 [shape = 's32[1]{0}', space=sflag, size = 0x4, scoped, tag = 'scoped memory for _forward.1']
    #allocation10 [shape = 'u8[1024]{0}', space=vmem, size = 0x400, scoped, tag = 'input window, operand 6, single buffered']
    #allocation11 [shape = 'u8[262144]{0}', space=vmem, size = 0x40000, scoped, tag = 'input window, operand 7, single buffered']
    #allocation12 [shape = 's32[1]{0}', space=sflag, size = 0x4, scoped, tag = 'scoped memory for _forward.1']
    #allocation13 [shape = 'u8[8192]{0}', space=vmem, size = 0x2000, scoped, tag = 'output window, operand 0, single buffered']
    %14 = vsyncpa [#allocation3], 0
    %15 = vsyncpa [#allocation6], 0
    %16 = vsyncpa [#allocation9], 0
    %17 = vsyncpa [#allocation12], 0
    %18 = vsyncpa [#allocation4], 0
    // Predicated region
    $region2: #{_forward.1} parent=1 // pred_check
      _
    $region3: #{_forward.1} parent=1 // pred_check_branch
      %20 = sbr.rel (0) target = $region5
    $region4: #{_forward.1} parent=1 // pred_region
      %s22 = ssub.s32 1024, 1024
      %23 = vsyncadd [#allocation3], %s22
      %s25 = sshll.u32 [#allocation2], 4
      %s26 = int_to_ptr.vmem [resolvable:$true] %s25
      %28 = dma.hbm_to_vmem [thread:$0]  %s0, 1024, %s26, [#allocation3]
    $region5: #{_forward.1} parent=1 // pred_fallthru
      _
    // Predicated region
    $region6: #{_forward.1} parent=1 // pred_check
      _
    $region7: #{_forward.1} parent=1 // pred_check_branch
      %30 = sbr.rel (0) target = $region9
    $region8: #{_forward.1} parent=1 // pred_region
      %s32 = ssub.s32 32768, 32768
      %33 = vsyncadd [#allocation6], %s32
      %s34 = sshll.u32 [#allocation5], 4
      %s35 = int_to_ptr.vmem [resolvable:$true] %s34
      %40 = dma.hbm_to_vmem [thread:$0]  %s1, 32768, %s35, [#allocation6], 512, 512, 32
    $region9: #{_forward.1} parent=1 // pred_fallthru
      _
    // Predicated region
    $region10: #{_forward.1} parent=1 // pred_check
      _
    $region11: #{_forward.1} parent=1 // pred_check_branch
      %42 = sbr.rel (0) target = $region13
    $region12: #{_forward.1} parent=1 // pred_region
      _
    $region13: #{_forward.1} parent=1 // pred_fallthru
      _
    // Predicated region
    $region14: #{_forward.1} parent=1 // pred_check
      _
    $region15: #{_forward.1} parent=1 // pred_check_branch
      %44 = sbr.rel (0) target = $region17
    $region16: #{_forward.1} parent=1 // pred_region
      %s46 = ssub.s32 16384, 16384
      %47 = vsyncadd [#allocation6], %s46
      %s48 = sshll.u32 [#allocation7], 4
      %s49 = int_to_ptr.vmem [resolvable:$true] %s48
      %54 = dma.hbm_to_vmem [thread:$0]  %s3, 16384, %s49, [#allocation6], 256, 256, 16
    $region17: #{_forward.1} parent=1 // pred_fallthru
      _
    // Predicated region
    $region18: #{_forward.1} parent=1 // pred_check
      _
    $region19: #{_forward.1} parent=1 // pred_check_branch
      %56 = sbr.rel (0) target = $region21
    $region20: #{_forward.1} parent=1 // pred_region
      _
    $region21: #{_forward.1} parent=1 // pred_fallthru
      _
    // Predicated region
    $region22: #{_forward.1} parent=1 // pred_check
      _
    $region23: #{_forward.1} parent=1 // pred_check_branch
      %58 = sbr.rel (0) target = $region25
    $region24: #{_forward.1} parent=1 // pred_region
      %s60 = ssub.s32 16384, 16384
      %61 = vsyncadd [#allocation9], %s60
      %s62 = sshll.u32 [#allocation8], 4
      %s63 = int_to_ptr.vmem [resolvable:$true] %s62
      %68 = dma.hbm_to_vmem [thread:$0]  %s5, 16384, %s63, [#allocation9], 256, 256, 16
    $region25: #{_forward.1} parent=1 // pred_fallthru
      _
    // Predicated region
    $region26: #{_forward.1} parent=1 // pred_check
      _
    $region27: #{_forward.1} parent=1 // pred_check_branch
      %70 = sbr.rel (0) target = $region29
    $region28: #{_forward.1} parent=1 // pred_region
      %s72 = ssub.s32 32, 32
      %73 = vsyncadd [#allocation9], %s72
      %s75 = sshll.u32 [#allocation10], 4
      %s76 = int_to_ptr.vmem [resolvable:$true] %s75
      %78 = dma.hbm_to_vmem [thread:$0]  %s6, 32, %s76, [#allocation9]
    $region29: #{_forward.1} parent=1 // pred_fallthru
      _
    // Predicated region
    $region30: #{_forward.1} parent=1 // pred_check
      _
    $region31: #{_forward.1} parent=1 // pred_check_branch
      %80 = sbr.rel (0) target = $region33
    $region32: #{_forward.1} parent=1 // pred_region
      %s82 = ssub.s32 8192, 8192
      %83 = vsyncadd [#allocation12], %s82
      %s84 = sshll.u32 [#allocation11], 4
      %s85 = int_to_ptr.vmem [resolvable:$true] %s84
      %90 = dma.hbm_to_vmem [thread:$0]  %s7, 8192, %s85, [#allocation12], 256, 256, 16
    $region33: #{_forward.1} parent=1 // pred_fallthru
      _
    // Predicated region
    $region34: #{_forward.1} parent=1 // pred_check
      _
    $region35: #{_forward.1} parent=1 // pred_check_branch
      %92 = sbr.rel (0) target = $region37
    $region36: #{_forward.1} parent=1 // pred_region
      _
    $region37: #{_forward.1} parent=1 // pred_fallthru
      _
    // Predicated region
    $region38: #{_forward.1} parent=1 // pred_check
      _
    $region39: #{_forward.1} parent=1 // pred_check_branch
      %94 = sbr.rel (0) target = $region41
    $region40: #{_forward.1} parent=1 // pred_region
      %95 = dma.done [#allocation3], 1024
    $region41: #{_forward.1} parent=1 // pred_fallthru
      _
    // Predicated region
    $region42: #{_forward.1} parent=1 // pred_check
      _
    $region43: #{_forward.1} parent=1 // pred_check_branch
      %97 = sbr.rel (0) target = $region45
    $region44: #{_forward.1} parent=1 // pred_region
      %98 = dma.done [#allocation6], 32768
    $region45: #{_forward.1} parent=1 // pred_fallthru
      _
    // Predicated region
    $region46: #{_forward.1} parent=1 // pred_check
      _
    $region47: #{_forward.1} parent=1 // pred_check_branch
      %100 = sbr.rel (0) target = $region49
    $region48: #{_forward.1} parent=1 // pred_region
      %101 = dma.done [#allocation6], 16384
    $region49: #{_forward.1} parent=1 // pred_fallthru
      _
    // Predicated region
    $region50: #{_forward.1} parent=1 // pred_check
      _
    $region51: #{_forward.1} parent=1 // pred_check_branch
      %103 = sbr.rel (0) target = $region53
    $region52: #{_forward.1} parent=1 // pred_region
      %104 = dma.done [#allocation9], 16384
    $region53: #{_forward.1} parent=1 // pred_fallthru
      _
    // Predicated region
    $region54: #{_forward.1} parent=1 // pred_check
      _
    $region55: #{_forward.1} parent=1 // pred_check_branch
      %106 = sbr.rel (0) target = $region57
    $region56: #{_forward.1} parent=1 // pred_region
      %107 = dma.done [#allocation9], 32
    $region57: #{_forward.1} parent=1 // pred_fallthru
      _
    // Predicated region
    $region58: #{_forward.1} parent=1 // pred_check
      _
    $region59: #{_forward.1} parent=1 // pred_check_branch
      %109 = sbr.rel (0) target = $region61
    $region60: #{_forward.1} parent=1 // pred_region
      %110 = dma.done [#allocation12], 8192
    $region61: #{_forward.1} parent=1 // pred_fallthru
      _
    %v111 = vld [vmem:[#allocation2] sm:$0xff]
    %v112 = vld [vmem:[#allocation2 + $0x8] sm:$0xff]
    %v113 = vld [vmem:[#allocation2 + $0x10] sm:$0xff]
    %v114 = vld [vmem:[#allocation2 + $0x18] sm:$0xff]
    %v115 = vld [vmem:[#allocation2 + $0x20] sm:$0xff]
    %v116 = vld [vmem:[#allocation2 + $0x28] sm:$0xff]
    %v117 = vld [vmem:[#allocation2 + $0x30] sm:$0xff]
    %v118 = vld [vmem:[#allocation2 + $0x38] sm:$0xff]
    %v119 = vld [vmem:[#allocation5] sm:$0xff]
    %v120 = vld [vmem:[#allocation5 + $0x8] sm:$0xff]
    %v121 = vld [vmem:[#allocation5 + $0x10] sm:$0xff]
    %v122 = vld [vmem:[#allocation5 + $0x18] sm:$0xff]
    %v123 = vld [vmem:[#allocation5 + $0x20] sm:$0xff]
    %v124 = vld [vmem:[#allocation5 + $0x28] sm:$0xff]
    %v125 = vld [vmem:[#allocation5 + $0x30] sm:$0xff]
    %v126 = vld [vmem:[#allocation5 + $0x38] sm:$0xff]
    %v127 = vld [vmem:[#allocation5 + $0x40] sm:$0xff]
    %v128 = vld [vmem:[#allocation5 + $0x48] sm:$0xff]
    %v129 = vld [vmem:[#allocation5 + $0x50] sm:$0xff]
    %v130 = vld [vmem:[#allocation5 + $0x58] sm:$0xff]
    %v131 = vld [vmem:[#allocation5 + $0x60] sm:$0xff]
    %v132 = vld [vmem:[#allocation5 + $0x68] sm:$0xff]
    %v133 = vld [vmem:[#allocation5 + $0x70] sm:$0xff]
    %v134 = vld [vmem:[#allocation5 + $0x78] sm:$0xff]
    %v135 = vld [vmem:[#allocation5 + $0x80] sm:$0xff]
    %v136 = vld [vmem:[#allocation5 + $0x88] sm:$0xff]
    %v137 = vld [vmem:[#allocation5 + $0x90] sm:$0xff]
    %v138 = vld [vmem:[#allocation5 + $0x98] sm:$0xff]
    %v139 = vld [vmem:[#allocation5 + $0xa0] sm:$0xff]
    %v140 = vld [vmem:[#allocation5 + $0xa8] sm:$0xff]
    %v141 = vld [vmem:[#allocation5 + $0xb0] sm:$0xff]
    %v142 = vld [vmem:[#allocation5 + $0xb8] sm:$0xff]
    %v143 = vld [vmem:[#allocation5 + $0xc0] sm:$0xff]
    %v144 = vld [vmem:[#allocation5 + $0xc8] sm:$0xff]
    %v145 = vld [vmem:[#allocation5 + $0xd0] sm:$0xff]
    %v146 = vld [vmem:[#allocation5 + $0xd8] sm:$0xff]
    %v147 = vld [vmem:[#allocation5 + $0xe0] sm:$0xff]
    %v148 = vld [vmem:[#allocation5 + $0xe8] sm:$0xff]
    %v149 = vld [vmem:[#allocation5 + $0xf0] sm:$0xff]
    %v150 = vld [vmem:[#allocation5 + $0xf8] sm:$0xff]
    %v151 = vld [vmem:[#allocation5 + $0x100] sm:$0xff]
    %v152 = vld [vmem:[#allocation5 + $0x108] sm:$0xff]
    %v153 = vld [vmem:[#allocation5 + $0x110] sm:$0xff]
    %v154 = vld [vmem:[#allocation5 + $0x118] sm:$0xff]
    %v155 = vld [vmem:[#allocation5 + $0x120] sm:$0xff]
    %v156 = vld [vmem:[#allocation5 + $0x128] sm:$0xff]
    %v157 = vld [vmem:[#allocation5 + $0x130] sm:$0xff]
    %v158 = vld [vmem:[#allocation5 + $0x138] sm:$0xff]
    %v159 = vld [vmem:[#allocation5 + $0x140] sm:$0xff]
    %v160 = vld [vmem:[#allocation5 + $0x148] sm:$0xff]
    %v161 = vld [vmem:[#allocation5 + $0x150] sm:$0xff]
    %v162 = vld [vmem:[#allocation5 + $0x158] sm:$0xff]
    %v163 = vld [vmem:[#allocation5 + $0x160] sm:$0xff]
    %v164 = vld [vmem:[#allocation5 + $0x168] sm:$0xff]
    %v165 = vld [vmem:[#allocation5 + $0x170] sm:$0xff]
    %v166 = vld [vmem:[#allocation5 + $0x178] sm:$0xff]
    %v167 = vld [vmem:[#allocation5 + $0x180] sm:$0xff]
    %v168 = vld [vmem:[#allocation5 + $0x188] sm:$0xff]
    %v169 = vld [vmem:[#allocation5 + $0x190] sm:$0xff]
    %v170 = vld [vmem:[#allocation5 + $0x198] sm:$0xff]
    %v171 = vld [vmem:[#allocation5 + $0x1a0] sm:$0xff]
    %v172 = vld [vmem:[#allocation5 + $0x1a8] sm:$0xff]
    %v173 = vld [vmem:[#allocation5 + $0x1b0] sm:$0xff]
    %v174 = vld [vmem:[#allocation5 + $0x1b8] sm:$0xff]
    %v175 = vld [vmem:[#allocation5 + $0x1c0] sm:$0xff]
    %v176 = vld [vmem:[#allocation5 + $0x1c8] sm:$0xff]
    %v177 = vld [vmem:[#allocation5 + $0x1d0] sm:$0xff]
    %v178 = vld [vmem:[#allocation5 + $0x1d8] sm:$0xff]
    %v179 = vld [vmem:[#allocation5 + $0x1e0] sm:$0xff]
    %v180 = vld [vmem:[#allocation5 + $0x1e8] sm:$0xff]
    %v181 = vld [vmem:[#allocation5 + $0x1f0] sm:$0xff]
    %v182 = vld [vmem:[#allocation5 + $0x1f8] sm:$0xff]
    %v183 = vld [vmem:[#allocation5 + $0x200] sm:$0xff]
    %v184 = vld [vmem:[#allocation5 + $0x208] sm:$0xff]
    %v185 = vld [vmem:[#allocation5 + $0x210] sm:$0xff]
    %v186 = vld [vmem:[#allocation5 + $0x218] sm:$0xff]
    %v187 = vld [vmem:[#allocation5 + $0x220] sm:$0xff]
    %v188 = vld [vmem:[#allocation5 + $0x228] sm:$0xff]
    %v189 = vld [vmem:[#allocation5 + $0x230] sm:$0xff]
    %v190 = vld [vmem:[#allocation5 + $0x238] sm:$0xff]
    %v191 = vld [vmem:[#allocation5 + $0x240] sm:$0xff]
    %v192 = vld [vmem:[#allocation5 + $0x248] sm:$0xff]
    %v193 = vld [vmem:[#allocation5 + $0x250] sm:$0xff]
    %v194 = vld [vmem:[#allocation5 + $0x258] sm:$0xff]
    %v195 = vld [vmem:[#allocation5 + $0x260] sm:$0xff]
    %v196 = vld [vmem:[#allocation5 + $0x268] sm:$0xff]
    %v197 = vld [vmem:[#allocation5 + $0x270] sm:$0xff]
    %v198 = vld [vmem:[#allocation5 + $0x278] sm:$0xff]
    %v199 = vld [vmem:[#allocation5 + $0x280] sm:$0xff]
    %v200 = vld [vmem:[#allocation5 + $0x288] sm:$0xff]
    %v201 = vld [vmem:[#allocation5 + $0x290] sm:$0xff]
    %v202 = vld [vmem:[#allocation5 + $0x298] sm:$0xff]
    %v203 = vld [vmem:[#allocation5 + $0x2a0] sm:$0xff]
    %v204 = vld [vmem:[#allocation5 + $0x2a8] sm:$0xff]
    %v205 = vld [vmem:[#allocation5 + $0x2b0] sm:$0xff]
    %v206 = vld [vmem:[#allocation5 + $0x2b8] sm:$0xff]
    %v207 = vld [vmem:[#allocation5 + $0x2c0] sm:$0xff]
    %v208 = vld [vmem:[#allocation5 + $0x2c8] sm:$0xff]
    %v209 = vld [vmem:[#allocation5 + $0x2d0] sm:$0xff]
    %v210 = vld [vmem:[#allocation5 + $0x2d8] sm:$0xff]
    %v211 = vld [vmem:[#allocation5 + $0x2e0] sm:$0xff]
    %v212 = vld [vmem:[#allocation5 + $0x2e8] sm:$0xff]
    %v213 = vld [vmem:[#allocation5 + $0x2f0] sm:$0xff]
    %v214 = vld [vmem:[#allocation5 + $0x2f8] sm:$0xff]
    %v215 = vld [vmem:[#allocation5 + $0x300] sm:$0xff]
    %v216 = vld [vmem:[#allocation5 + $0x308] sm:$0xff]
    %v217 = vld [vmem:[#allocation5 + $0x310] sm:$0xff]
    %v218 = vld [vmem:[#allocation5 + $0x318] sm:$0xff]
    %v219 = vld [vmem:[#allocation5 + $0x320] sm:$0xff]
    %v220 = vld [vmem:[#allocation5 + $0x328] sm:$0xff]
    %v221 = vld [vmem:[#allocation5 + $0x330] sm:$0xff]
    %v222 = vld [vmem:[#allocation5 + $0x338] sm:$0xff]
    %v223 = vld [vmem:[#allocation5 + $0x340] sm:$0xff]
    %v224 = vld [vmem:[#allocation5 + $0x348] sm:$0xff]
    %v225 = vld [vmem:[#allocation5 + $0x350] sm:$0xff]
    %v226 = vld [vmem:[#allocation5 + $0x358] sm:$0xff]
    %v227 = vld [vmem:[#allocation5 + $0x360] sm:$0xff]
    %v228 = vld [vmem:[#allocation5 + $0x368] sm:$0xff]
    %v229 = vld [vmem:[#allocation5 + $0x370] sm:$0xff]
    %v230 = vld [vmem:[#allocation5 + $0x378] sm:$0xff]
    %v231 = vld [vmem:[#allocation5 + $0x380] sm:$0xff]
    %v232 = vld [vmem:[#allocation5 + $0x388] sm:$0xff]
    %v233 = vld [vmem:[#allocation5 + $0x390] sm:$0xff]
    %v234 = vld [vmem:[#allocation5 + $0x398] sm:$0xff]
    %v235 = vld [vmem:[#allocation5 + $0x3a0] sm:$0xff]
    %v236 = vld [vmem:[#allocation5 + $0x3a8] sm:$0xff]
    %v237 = vld [vmem:[#allocation5 + $0x3b0] sm:$0xff]
    %v238 = vld [vmem:[#allocation5 + $0x3b8] sm:$0xff]
    %v239 = vld [vmem:[#allocation5 + $0x3c0] sm:$0xff]
    %v240 = vld [vmem:[#allocation5 + $0x3c8] sm:$0xff]
    %v241 = vld [vmem:[#allocation5 + $0x3d0] sm:$0xff]
    %v242 = vld [vmem:[#allocation5 + $0x3d8] sm:$0xff]
    %v243 = vld [vmem:[#allocation5 + $0x3e0] sm:$0xff]
    %v244 = vld [vmem:[#allocation5 + $0x3e8] sm:$0xff]
    %v245 = vld [vmem:[#allocation5 + $0x3f0] sm:$0xff]
    %v246 = vld [vmem:[#allocation5 + $0x3f8] sm:$0xff]
    %v247 = vld [vmem:[#allocation5 + $0x400] sm:$0xff]
    %v248 = vld [vmem:[#allocation5 + $0x408] sm:$0xff]
    %v249 = vld [vmem:[#allocation5 + $0x410] sm:$0xff]
    %v250 = vld [vmem:[#allocation5 + $0x418] sm:$0xff]
    %v251 = vld [vmem:[#allocation5 + $0x420] sm:$0xff]
    %v252 = vld [vmem:[#allocation5 + $0x428] sm:$0xff]
    %v253 = vld [vmem:[#allocation5 + $0x430] sm:$0xff]
    %v254 = vld [vmem:[#allocation5 + $0x438] sm:$0xff]
    %v255 = vld [vmem:[#allocation5 + $0x440] sm:$0xff]
    %v256 = vld [vmem:[#allocation5 + $0x448] sm:$0xff]
    %v257 = vld [vmem:[#allocation5 + $0x450] sm:$0xff]
    %v258 = vld [vmem:[#allocation5 + $0x458] sm:$0xff]
    %v259 = vld [vmem:[#allocation5 + $0x460] sm:$0xff]
    %v260 = vld [vmem:[#allocation5 + $0x468] sm:$0xff]
    %v261 = vld [vmem:[#allocation5 + $0x470] sm:$0xff]
    %v262 = vld [vmem:[#allocation5 + $0x478] sm:$0xff]
    %v263 = vld [vmem:[#allocation5 + $0x480] sm:$0xff]
    %v264 = vld [vmem:[#allocation5 + $0x488] sm:$0xff]
    %v265 = vld [vmem:[#allocation5 + $0x490] sm:$0xff]
    %v266 = vld [vmem:[#allocation5 + $0x498] sm:$0xff]
    %v267 = vld [vmem:[#allocation5 + $0x4a0] sm:$0xff]
    %v268 = vld [vmem:[#allocation5 + $0x4a8] sm:$0xff]
    %v269 = vld [vmem:[#allocation5 + $0x4b0] sm:$0xff]
    %v270 = vld [vmem:[#allocation5 + $0x4b8] sm:$0xff]
    %v271 = vld [vmem:[#allocation5 + $0x4c0] sm:$0xff]
    %v272 = vld [vmem:[#allocation5 + $0x4c8] sm:$0xff]
    %v273 = vld [vmem:[#allocation5 + $0x4d0] sm:$0xff]
    %v274 = vld [vmem:[#allocation5 + $0x4d8] sm:$0xff]
    %v275 = vld [vmem:[#allocation5 + $0x4e0] sm:$0xff]
    %v276 = vld [vmem:[#allocation5 + $0x4e8] sm:$0xff]
    %v277 = vld [vmem:[#allocation5 + $0x4f0] sm:$0xff]
    %v278 = vld [vmem:[#allocation5 + $0x4f8] sm:$0xff]
    %v279 = vld [vmem:[#allocation5 + $0x500] sm:$0xff]
    %v280 = vld [vmem:[#allocation5 + $0x508] sm:$0xff]
    %v281 = vld [vmem:[#allocation5 + $0x510] sm:$0xff]
    %v282 = vld [vmem:[#allocation5 + $0x518] sm:$0xff]
    %v283 = vld [vmem:[#allocation5 + $0x520] sm:$0xff]
    %v284 = vld [vmem:[#allocation5 + $0x528] sm:$0xff]
    %v285 = vld [vmem:[#allocation5 + $0x530] sm:$0xff]
    %v286 = vld [vmem:[#allocation5 + $0x538] sm:$0xff]
    %v287 = vld [vmem:[#allocation5 + $0x540] sm:$0xff]
    %v288 = vld [vmem:[#allocation5 + $0x548] sm:$0xff]
    %v289 = vld [vmem:[#allocation5 + $0x550] sm:$0xff]
    %v290 = vld [vmem:[#allocation5 + $0x558] sm:$0xff]
    %v291 = vld [vmem:[#allocation5 + $0x560] sm:$0xff]
    %v292 = vld [vmem:[#allocation5 + $0x568] sm:$0xff]
    %v293 = vld [vmem:[#allocation5 + $0x570] sm:$0xff]
    %v294 = vld [vmem:[#allocation5 + $0x578] sm:$0xff]
    %v295 = vld [vmem:[#allocation5 + $0x580] sm:$0xff]
    %v296 = vld [vmem:[#allocation5 + $0x588] sm:$0xff]
    %v297 = vld [vmem:[#allocation5 + $0x590] sm:$0xff]
    %v298 = vld [vmem:[#allocation5 + $0x598] sm:$0xff]
    %v299 = vld [vmem:[#allocation5 + $0x5a0] sm:$0xff]
    %v300 = vld [vmem:[#allocation5 + $0x5a8] sm:$0xff]
    %v301 = vld [vmem:[#allocation5 + $0x5b0] sm:$0xff]
    %v302 = vld [vmem:[#allocation5 + $0x5b8] sm:$0xff]
    %v303 = vld [vmem:[#allocation5 + $0x5c0] sm:$0xff]
    %v304 = vld [vmem:[#allocation5 + $0x5c8] sm:$0xff]
    %v305 = vld [vmem:[#allocation5 + $0x5d0] sm:$0xff]
    %v306 = vld [vmem:[#allocation5 + $0x5d8] sm:$0xff]
    %v307 = vld [vmem:[#allocation5 + $0x5e0] sm:$0xff]
    %v308 = vld [vmem:[#allocation5 + $0x5e8] sm:$0xff]
    %v309 = vld [vmem:[#allocation5 + $0x5f0] sm:$0xff]
    %v310 = vld [vmem:[#allocation5 + $0x5f8] sm:$0xff]
    %v311 = vld [vmem:[#allocation5 + $0x600] sm:$0xff]
    %v312 = vld [vmem:[#allocation5 + $0x608] sm:$0xff]
    %v313 = vld [vmem:[#allocation5 + $0x610] sm:$0xff]
    %v314 = vld [vmem:[#allocation5 + $0x618] sm:$0xff]
    %v315 = vld [vmem:[#allocation5 + $0x620] sm:$0xff]
    %v316 = vld [vmem:[#allocation5 + $0x628] sm:$0xff]
    %v317 = vld [vmem:[#allocation5 + $0x630] sm:$0xff]
    %v318 = vld [vmem:[#allocation5 + $0x638] sm:$0xff]
    %v319 = vld [vmem:[#allocation5 + $0x640] sm:$0xff]
    %v320 = vld [vmem:[#allocation5 + $0x648] sm:$0xff]
    %v321 = vld [vmem:[#allocation5 + $0x650] sm:$0xff]
    %v322 = vld [vmem:[#allocation5 + $0x658] sm:$0xff]
    %v323 = vld [vmem:[#allocation5 + $0x660] sm:$0xff]
    %v324 = vld [vmem:[#allocation5 + $0x668] sm:$0xff]
    %v325 = vld [vmem:[#allocation5 + $0x670] sm:$0xff]
    %v326 = vld [vmem:[#allocation5 + $0x678] sm:$0xff]
    %v327 = vld [vmem:[#allocation5 + $0x680] sm:$0xff]
    %v328 = vld [vmem:[#allocation5 + $0x688] sm:$0xff]
    %v329 = vld [vmem:[#allocation5 + $0x690] sm:$0xff]
    %v330 = vld [vmem:[#allocation5 + $0x698] sm:$0xff]
    %v331 = vld [vmem:[#allocation5 + $0x6a0] sm:$0xff]
    %v332 = vld [vmem:[#allocation5 + $0x6a8] sm:$0xff]
    %v333 = vld [vmem:[#allocation5 + $0x6b0] sm:$0xff]
    %v334 = vld [vmem:[#allocation5 + $0x6b8] sm:$0xff]
    %v335 = vld [vmem:[#allocation5 + $0x6c0] sm:$0xff]
    %v336 = vld [vmem:[#allocation5 + $0x6c8] sm:$0xff]
    %v337 = vld [vmem:[#allocation5 + $0x6d0] sm:$0xff]
    %v338 = vld [vmem:[#allocation5 + $0x6d8] sm:$0xff]
    %v339 = vld [vmem:[#allocation5 + $0x6e0] sm:$0xff]
    %v340 = vld [vmem:[#allocation5 + $0x6e8] sm:$0xff]
    %v341 = vld [vmem:[#allocation5 + $0x6f0] sm:$0xff]
    %v342 = vld [vmem:[#allocation5 + $0x6f8] sm:$0xff]
    %v343 = vld [vmem:[#allocation5 + $0x700] sm:$0xff]
    %v344 = vld [vmem:[#allocation5 + $0x708] sm:$0xff]
    %v345 = vld [vmem:[#allocation5 + $0x710] sm:$0xff]
    %v346 = vld [vmem:[#allocation5 + $0x718] sm:$0xff]
    %v347 = vld [vmem:[#allocation5 + $0x720] sm:$0xff]
    %v348 = vld [vmem:[#allocation5 + $0x728] sm:$0xff]
    %v349 = vld [vmem:[#allocation5 + $0x730] sm:$0xff]
    %v350 = vld [vmem:[#allocation5 + $0x738] sm:$0xff]
    %v351 = vld [vmem:[#allocation5 + $0x740] sm:$0xff]
    %v352 = vld [vmem:[#allocation5 + $0x748] sm:$0xff]
    %v353 = vld [vmem:[#allocation5 + $0x750] sm:$0xff]
    %v354 = vld [vmem:[#allocation5 + $0x758] sm:$0xff]
    %v355 = vld [vmem:[#allocation5 + $0x760] sm:$0xff]
    %v356 = vld [vmem:[#allocation5 + $0x768] sm:$0xff]
    %v357 = vld [vmem:[#allocation5 + $0x770] sm:$0xff]
    %v358 = vld [vmem:[#allocation5 + $0x778] sm:$0xff]
    %v359 = vld [vmem:[#allocation5 + $0x780] sm:$0xff]
    %v360 = vld [vmem:[#allocation5 + $0x788] sm:$0xff]
    %v361 = vld [vmem:[#allocation5 + $0x790] sm:$0xff]
    %v362 = vld [vmem:[#allocation5 + $0x798] sm:$0xff]
    %v363 = vld [vmem:[#allocation5 + $0x7a0] sm:$0xff]
    %v364 = vld [vmem:[#allocation5 + $0x7a8] sm:$0xff]
    %v365 = vld [vmem:[#allocation5 + $0x7b0] sm:$0xff]
    %v366 = vld [vmem:[#allocation5 + $0x7b8] sm:$0xff]
    %v367 = vld [vmem:[#allocation5 + $0x7c0] sm:$0xff]
    %v368 = vld [vmem:[#allocation5 + $0x7c8] sm:$0xff]
    %v369 = vld [vmem:[#allocation5 + $0x7d0] sm:$0xff]
    %v370 = vld [vmem:[#allocation5 + $0x7d8] sm:$0xff]
    %v371 = vld [vmem:[#allocation5 + $0x7e0] sm:$0xff]
    %v372 = vld [vmem:[#allocation5 + $0x7e8] sm:$0xff]
    %v373 = vld [vmem:[#allocation5 + $0x7f0] sm:$0xff]
    %v374 = vld [vmem:[#allocation5 + $0x7f8] sm:$0xff]
    %v375 = vld [vmem:[%s2] sm:$0xf]
    %v377 = vlaneseq
    %v378 = vshrl.u32 %v377, 7
    %v379 = vsub.s32 0, %v378
    %v380 = vrot.slane %v375, %v379
    %v381 = vlaneseq
    %v382 = vshrl.u32 %v381, 7
    %v383 = vsub.s32 1, %v382
    %v384 = vrot.slane %v375, %v383
    %v385 = vlaneseq
    %v386 = vshrl.u32 %v385, 7
    %v387 = vsub.s32 2, %v386
    %v388 = vrot.slane %v375, %v387
    %v389 = vlaneseq
    %v390 = vshrl.u32 %v389, 7
    %v391 = vsub.s32 3, %v390
    %v392 = vrot.slane %v375, %v391
    %397 = vmatprep.subr.mxu0 %v120
    %398 = vmatpush1.msra.mxu0 %v119
    %399 = vmatprep.subr.mxu0 %v124
    %400 = vmatpush1.msra.mxu0 %v123
    %401 = vmatprep.subr.mxu0 %v128
    %402 = vmatpush1.msra.mxu0 %v127
    %403 = vmatprep.subr.mxu0 %v132
    %404 = vmatpush1.msra.mxu0 %v131
    %405 = vmatprep.subr.mxu0 %v136
    %406 = vmatpush1.msra.mxu0 %v135
    %407 = vmatprep.subr.mxu0 %v140
    %408 = vmatpush1.msra.mxu0 %v139
    %409 = vmatprep.subr.mxu0 %v144
    %410 = vmatpush1.msra.mxu0 %v143
    %411 = vmatprep.subr.mxu0 %v148
    %412 = vmatpush1.msra.mxu0 %v147
    %413 = vmatprep.subr.mxu0 %v152
    %414 = vmatpush1.msra.mxu0 %v151
    %415 = vmatprep.subr.mxu0 %v156
    %416 = vmatpush1.msra.mxu0 %v155
    %417 = vmatprep.subr.mxu0 %v160
    %418 = vmatpush1.msra.mxu0 %v159
    %419 = vmatprep.subr.mxu0 %v164
    %420 = vmatpush1.msra.mxu0 %v163
    %421 = vmatprep.subr.mxu0 %v168
    %422 = vmatpush1.msra.mxu0 %v167
    %423 = vmatprep.subr.mxu0 %v172
    %424 = vmatpush1.msra.mxu0 %v171
    %425 = vmatprep.subr.mxu0 %v176
    %426 = vmatpush1.msra.mxu0 %v175
    %427 = vmatprep.subr.mxu0 %v180
    %428 = vmatpush1.msra.mxu0 %v179
    %429 = vmatprep.subr.mxu0 %v184
    %430 = vmatpush1.msra.mxu0 %v183
    %431 = vmatprep.subr.mxu0 %v188
    %432 = vmatpush1.msra.mxu0 %v187
    %433 = vmatprep.subr.mxu0 %v192
    %434 = vmatpush1.msra.mxu0 %v191
    %435 = vmatprep.subr.mxu0 %v196
    %436 = vmatpush1.msra.mxu0 %v195
    %437 = vmatprep.subr.mxu0 %v200
    %438 = vmatpush1.msra.mxu0 %v199
    %439 = vmatprep.subr.mxu0 %v204
    %440 = vmatpush1.msra.mxu0 %v203
    %441 = vmatprep.subr.mxu0 %v208
    %442 = vmatpush1.msra.mxu0 %v207
    %443 = vmatprep.subr.mxu0 %v212
    %444 = vmatpush1.msra.mxu0 %v211
    %445 = vmatprep.subr.mxu0 %v216
    %446 = vmatpush1.msra.mxu0 %v215
    %447 = vmatprep.subr.mxu0 %v220
    %448 = vmatpush1.msra.mxu0 %v219
    %449 = vmatprep.subr.mxu0 %v224
    %450 = vmatpush1.msra.mxu0 %v223
    %451 = vmatprep.subr.mxu0 %v228
    %452 = vmatpush1.msra.mxu0 %v227
    %453 = vmatprep.subr.mxu0 %v232
    %454 = vmatpush1.msra.mxu0 %v231
    %455 = vmatprep.subr.mxu0 %v236
    %456 = vmatpush1.msra.mxu0 %v235
    %457 = vmatprep.subr.mxu0 %v240
    %458 = vmatpush1.msra.mxu0 %v239
    %459 = vmatprep.subr.mxu0 %v244
    %460 = vmatpush1.msra.mxu0 %v243
    %461 = vmatprep.mubr.f32.mxu0 %v112
    %462 = vmatmul.mubr.f32.gmra.mrb[0].mxu0 %v111
    %v463 = vpop.f32.mrb[0].mxu0
    %v464 = vadd.f32 %v380, %v463
    %v465 = vpop.f32.mrb[0].mxu0
    %v466 = vadd.f32 %v384, %v465
    %467 = vdwg.mxu0
    %468 = vmatprep.subr.mxu0 %v248
    %469 = vmatpush1.msra.mxu0 %v247
    %470 = vmatprep.subr.mxu0 %v252
    %471 = vmatpush1.msra.mxu0 %v251
    %472 = vmatprep.subr.mxu0 %v256
    %473 = vmatpush1.msra.mxu0 %v255
    %474 = vmatprep.subr.mxu0 %v260
    %475 = vmatpush1.msra.mxu0 %v259
    %476 = vmatprep.subr.mxu0 %v264
    %477 = vmatpush1.msra.mxu0 %v263
    %478 = vmatprep.subr.mxu0 %v268
    %479 = vmatpush1.msra.mxu0 %v267
    %480 = vmatprep.subr.mxu0 %v272
    %481 = vmatpush1.msra.mxu0 %v271
    %482 = vmatprep.subr.mxu0 %v276
    %483 = vmatpush1.msra.mxu0 %v275
    %484 = vmatprep.subr.mxu0 %v280
    %485 = vmatpush1.msra.mxu0 %v279
    %486 = vmatprep.subr.mxu0 %v284
    %487 = vmatpush1.msra.mxu0 %v283
    %488 = vmatprep.subr.mxu0 %v288
    %489 = vmatpush1.msra.mxu0 %v287
    %490 = vmatprep.subr.mxu0 %v292
    %491 = vmatpush1.msra.mxu0 %v291
    %492 = vmatprep.subr.mxu0 %v296
    %493 = vmatpush1.msra.mxu0 %v295
    %494 = vmatprep.subr.mxu0 %v300
    %495 = vmatpush1.msra.mxu0 %v299
    %496 = vmatprep.subr.mxu0 %v304
    %497 = vmatpush1.msra.mxu0 %v303
    %498 = vmatprep.subr.mxu0 %v308
    %499 = vmatpush1.msra.mxu0 %v307
    %500 = vmatprep.subr.mxu0 %v312
    %501 = vmatpush1.msra.mxu0 %v311
    %502 = vmatprep.subr.mxu0 %v316
    %503 = vmatpush1.msra.mxu0 %v315
    %504 = vmatprep.subr.mxu0 %v320
    %505 = vmatpush1.msra.mxu0 %v319
    %506 = vmatprep.subr.mxu0 %v324
    %507 = vmatpush1.msra.mxu0 %v323
    %508 = vmatprep.subr.mxu0 %v328
    %509 = vmatpush1.msra.mxu0 %v327
    %510 = vmatprep.subr.mxu0 %v332
    %511 = vmatpush1.msra.mxu0 %v331
    %512 = vmatprep.subr.mxu0 %v336
    %513 = vmatpush1.msra.mxu0 %v335
    %514 = vmatprep.subr.mxu0 %v340
    %515 = vmatpush1.msra.mxu0 %v339
    %516 = vmatprep.subr.mxu0 %v344
    %517 = vmatpush1.msra.mxu0 %v343
    %518 = vmatprep.subr.mxu0 %v348
    %519 = vmatpush1.msra.mxu0 %v347
    %520 = vmatprep.subr.mxu0 %v352
    %521 = vmatpush1.msra.mxu0 %v351
    %522 = vmatprep.subr.mxu0 %v356
    %523 = vmatpush1.msra.mxu0 %v355
    %524 = vmatprep.subr.mxu0 %v360
    %525 = vmatpush1.msra.mxu0 %v359
    %526 = vmatprep.subr.mxu0 %v364
    %527 = vmatpush1.msra.mxu0 %v363
    %528 = vmatprep.subr.mxu0 %v368
    %529 = vmatpush1.msra.mxu0 %v367
    %530 = vmatprep.subr.mxu0 %v372
    %531 = vmatpush1.msra.mxu0 %v371
    %532 = vmatprep.mubr.f32.mxu0 %v114
    %533 = vmatmul.mubr.f32.gmra.mrb[0].mxu0 %v113
    %v534 = vpop.f32.mrb[0].mxu0
    %v535 = vadd.f32 %v464, %v534
    %v536 = vpop.f32.mrb[0].mxu0
    %v537 = vadd.f32 %v466, %v536
    %538 = vdwg.mxu0
    %539 = vmatprep.subr.mxu0 %v122
    %540 = vmatpush1.msra.mxu0 %v121
    %541 = vmatprep.subr.mxu0 %v126
    %542 = vmatpush1.msra.mxu0 %v125
    %543 = vmatprep.subr.mxu0 %v130
    %544 = vmatpush1.msra.mxu0 %v129
    %545 = vmatprep.subr.mxu0 %v134
    %546 = vmatpush1.msra.mxu0 %v133
    %547 = vmatprep.subr.mxu0 %v138
    %548 = vmatpush1.msra.mxu0 %v137
    %549 = vmatprep.subr.mxu0 %v142
    %550 = vmatpush1.msra.mxu0 %v141
    %551 = vmatprep.subr.mxu0 %v146
    %552 = vmatpush1.msra.mxu0 %v145
    %553 = vmatprep.subr.mxu0 %v150
    %554 = vmatpush1.msra.mxu0 %v149
    %555 = vmatprep.subr.mxu0 %v154
    %556 = vmatpush1.msra.mxu0 %v153
    %557 = vmatprep.subr.mxu0 %v158
    %558 = vmatpush1.msra.mxu0 %v157
    %559 = vmatprep.subr.mxu0 %v162
    %560 = vmatpush1.msra.mxu0 %v161
    %561 = vmatprep.subr.mxu0 %v166
    %562 = vmatpush1.msra.mxu0 %v165
    %563 = vmatprep.subr.mxu0 %v170
    %564 = vmatpush1.msra.mxu0 %v169
    %565 = vmatprep.subr.mxu0 %v174
    %566 = vmatpush1.msra.mxu0 %v173
    %567 = vmatprep.subr.mxu0 %v178
    %568 = vmatpush1.msra.mxu0 %v177
    %569 = vmatprep.subr.mxu0 %v182
    %570 = vmatpush1.msra.mxu0 %v181
    %571 = vmatprep.subr.mxu0 %v186
    %572 = vmatpush1.msra.mxu0 %v185
    %573 = vmatprep.subr.mxu0 %v190
    %574 = vmatpush1.msra.mxu0 %v189
    %575 = vmatprep.subr.mxu0 %v194
    %576 = vmatpush1.msra.mxu0 %v193
    %577 = vmatprep.subr.mxu0 %v198
    %578 = vmatpush1.msra.mxu0 %v197
    %579 = vmatprep.subr.mxu0 %v202
    %580 = vmatpush1.msra.mxu0 %v201
    %581 = vmatprep.subr.mxu0 %v206
    %582 = vmatpush1.msra.mxu0 %v205
    %583 = vmatprep.subr.mxu0 %v210
    %584 = vmatpush1.msra.mxu0 %v209
    %585 = vmatprep.subr.mxu0 %v214
    %586 = vmatpush1.msra.mxu0 %v213
    %587 = vmatprep.subr.mxu0 %v218
    %588 = vmatpush1.msra.mxu0 %v217
    %589 = vmatprep.subr.mxu0 %v222
    %590 = vmatpush1.msra.mxu0 %v221
    %591 = vmatprep.subr.mxu0 %v226
    %592 = vmatpush1.msra.mxu0 %v225
    %593 = vmatprep.subr.mxu0 %v230
    %594 = vmatpush1.msra.mxu0 %v229
    %595 = vmatprep.subr.mxu0 %v234
    %596 = vmatpush1.msra.mxu0 %v233
    %597 = vmatprep.subr.mxu0 %v238
    %598 = vmatpush1.msra.mxu0 %v237
    %599 = vmatprep.subr.mxu0 %v242
    %600 = vmatpush1.msra.mxu0 %v241
    %601 = vmatprep.subr.mxu0 %v246
    %602 = vmatpush1.msra.mxu0 %v245
    %603 = vmatprep.mubr.f32.mxu0 %v112
    %604 = vmatmul.mubr.f32.gmra.mrb[0].mxu0 %v111
    %v605 = vpop.f32.mrb[0].mxu0
    %v606 = vadd.f32 %v388, %v605
    %v607 = vpop.f32.mrb[0].mxu0
    %v608 = vadd.f32 %v392, %v607
    %609 = vdwg.mxu0
    %610 = vmatprep.subr.mxu0 %v250
    %611 = vmatpush1.msra.mxu0 %v249
    %612 = vmatprep.subr.mxu0 %v254
    %613 = vmatpush1.msra.mxu0 %v253
    %614 = vmatprep.subr.mxu0 %v258
    %615 = vmatpush1.msra.mxu0 %v257
    %616 = vmatprep.subr.mxu0 %v262
    %617 = vmatpush1.msra.mxu0 %v261
    %618 = vmatprep.subr.mxu0 %v266
    %619 = vmatpush1.msra.mxu0 %v265
    %620 = vmatprep.subr.mxu0 %v270
    %621 = vmatpush1.msra.mxu0 %v269
    %622 = vmatprep.subr.mxu0 %v274
    %623 = vmatpush1.msra.mxu0 %v273
    %624 = vmatprep.subr.mxu0 %v278
    %625 = vmatpush1.msra.mxu0 %v277
    %626 = vmatprep.subr.mxu0 %v282
    %627 = vmatpush1.msra.mxu0 %v281
    %628 = vmatprep.subr.mxu0 %v286
    %629 = vmatpush1.msra.mxu0 %v285
    %630 = vmatprep.subr.mxu0 %v290
    %631 = vmatpush1.msra.mxu0 %v289
    %632 = vmatprep.subr.mxu0 %v294
    %633 = vmatpush1.msra.mxu0 %v293
    %634 = vmatprep.subr.mxu0 %v298
    %635 = vmatpush1.msra.mxu0 %v297
    %636 = vmatprep.subr.mxu0 %v302
    %637 = vmatpush1.msra.mxu0 %v301
    %638 = vmatprep.subr.mxu0 %v306
    %639 = vmatpush1.msra.mxu0 %v305
    %640 = vmatprep.subr.mxu0 %v310
    %641 = vmatpush1.msra.mxu0 %v309
    %642 = vmatprep.subr.mxu0 %v314
    %643 = vmatpush1.msra.mxu0 %v313
    %644 = vmatprep.subr.mxu0 %v318
    %645 = vmatpush1.msra.mxu0 %v317
    %646 = vmatprep.subr.mxu0 %v322
    %647 = vmatpush1.msra.mxu0 %v321
    %648 = vmatprep.subr.mxu0 %v326
    %649 = vmatpush1.msra.mxu0 %v325
    %650 = vmatprep.subr.mxu0 %v330
    %651 = vmatpush1.msra.mxu0 %v329
    %652 = vmatprep.subr.mxu0 %v334
    %653 = vmatpush1.msra.mxu0 %v333
    %654 = vmatprep.subr.mxu0 %v338
    %655 = vmatpush1.msra.mxu0 %v337
    %656 = vmatprep.subr.mxu0 %v342
    %657 = vmatpush1.msra.mxu0 %v341
    %658 = vmatprep.subr.mxu0 %v346
    %659 = vmatpush1.msra.mxu0 %v345
    %660 = vmatprep.subr.mxu0 %v350
    %661 = vmatpush1.msra.mxu0 %v349
    %662 = vmatprep.subr.mxu0 %v354
    %663 = vmatpush1.msra.mxu0 %v353
    %664 = vmatprep.subr.mxu0 %v358
    %665 = vmatpush1.msra.mxu0 %v357
    %666 = vmatprep.subr.mxu0 %v362
    %667 = vmatpush1.msra.mxu0 %v361
    %668 = vmatprep.subr.mxu0 %v366
    %669 = vmatpush1.msra.mxu0 %v365
    %670 = vmatprep.subr.mxu0 %v370
    %671 = vmatpush1.msra.mxu0 %v369
    %672 = vmatprep.subr.mxu0 %v374
    %673 = vmatpush1.msra.mxu0 %v373
    %674 = vmatprep.mubr.f32.mxu0 %v114
    %675 = vmatmul.mubr.f32.gmra.mrb[0].mxu0 %v113
    %v676 = vpop.f32.mrb[0].mxu0
    %v677 = vadd.f32 %v606, %v676
    %v678 = vpop.f32.mrb[0].mxu0
    %v679 = vadd.f32 %v608, %v678
    %680 = vdwg.mxu0
    %v681 = vmax.f32 %v535, 0.0
    %v682 = vmax.f32 %v537, 0.0
    %v683 = vmax.f32 %v677, 0.0
    %v684 = vmax.f32 %v679, 0.0
    %v685 = vld [vmem:[#allocation7] sm:$0xff]
    %v686 = vld [vmem:[#allocation7 + $0x8] sm:$0xff]
    %v687 = vld [vmem:[#allocation7 + $0x10] sm:$0xff]
    %v688 = vld [vmem:[#allocation7 + $0x18] sm:$0xff]
    %v689 = vld [vmem:[#allocation7 + $0x20] sm:$0xff]
    %v690 = vld [vmem:[#allocation7 + $0x28] sm:$0xff]
    %v691 = vld [vmem:[#allocation7 + $0x30] sm:$0xff]
    %v692 = vld [vmem:[#allocation7 + $0x38] sm:$0xff]
    %v693 = vld [vmem:[#allocation7 + $0x40] sm:$0xff]
    %v694 = vld [vmem:[#allocation7 + $0x48] sm:$0xff]
    %v695 = vld [vmem:[#allocation7 + $0x50] sm:$0xff]
    %v696 = vld [vmem:[#allocation7 + $0x58] sm:$0xff]
    %v697 = vld [vmem:[#allocation7 + $0x60] sm:$0xff]
    %v698 = vld [vmem:[#allocation7 + $0x68] sm:$0xff]
    %v699 = vld [vmem:[#allocation7 + $0x70] sm:$0xff]
    %v700 = vld [vmem:[#allocation7 + $0x78] sm:$0xff]
    %v701 = vld [vmem:[#allocation7 + $0x80] sm:$0xff]
    %v702 = vld [vmem:[#allocation7 + $0x88] sm:$0xff]
    %v703 = vld [vmem:[#allocation7 + $0x90] sm:$0xff]
    %v704 = vld [vmem:[#allocation7 + $0x98] sm:$0xff]
    %v705 = vld [vmem:[#allocation7 + $0xa0] sm:$0xff]
    %v706 = vld [vmem:[#allocation7 + $0xa8] sm:$0xff]
    %v707 = vld [vmem:[#allocation7 + $0xb0] sm:$0xff]
    %v708 = vld [vmem:[#allocation7 + $0xb8] sm:$0xff]
    %v709 = vld [vmem:[#allocation7 + $0xc0] sm:$0xff]
    %v710 = vld [vmem:[#allocation7 + $0xc8] sm:$0xff]
    %v711 = vld [vmem:[#allocation7 + $0xd0] sm:$0xff]
    %v712 = vld [vmem:[#allocation7 + $0xd8] sm:$0xff]
    %v713 = vld [vmem:[#allocation7 + $0xe0] sm:$0xff]
    %v714 = vld [vmem:[#allocation7 + $0xe8] sm:$0xff]
    %v715 = vld [vmem:[#allocation7 + $0xf0] sm:$0xff]
    %v716 = vld [vmem:[#allocation7 + $0xf8] sm:$0xff]
    %v717 = vld [vmem:[#allocation7 + $0x100] sm:$0xff]
    %v718 = vld [vmem:[#allocation7 + $0x108] sm:$0xff]
    %v719 = vld [vmem:[#allocation7 + $0x110] sm:$0xff]
    %v720 = vld [vmem:[#allocation7 + $0x118] sm:$0xff]
    %v721 = vld [vmem:[#allocation7 + $0x120] sm:$0xff]
    %v722 = vld [vmem:[#allocation7 + $0x128] sm:$0xff]
    %v723 = vld [vmem:[#allocation7 + $0x130] sm:$0xff]
    %v724 = vld [vmem:[#allocation7 + $0x138] sm:$0xff]
    %v725 = vld [vmem:[#allocation7 + $0x140] sm:$0xff]
    %v726 = vld [vmem:[#allocation7 + $0x148] sm:$0xff]
    %v727 = vld [vmem:[#allocation7 + $0x150] sm:$0xff]
    %v728 = vld [vmem:[#allocation7 + $0x158] sm:$0xff]
    %v729 = vld [vmem:[#allocation7 + $0x160] sm:$0xff]
    %v730 = vld [vmem:[#allocation7 + $0x168] sm:$0xff]
    %v731 = vld [vmem:[#allocation7 + $0x170] sm:$0xff]
    %v732 = vld [vmem:[#allocation7 + $0x178] sm:$0xff]
    %v733 = vld [vmem:[#allocation7 + $0x180] sm:$0xff]
    %v734 = vld [vmem:[#allocation7 + $0x188] sm:$0xff]
    %v735 = vld [vmem:[#allocation7 + $0x190] sm:$0xff]
    %v736 = vld [vmem:[#allocation7 + $0x198] sm:$0xff]
    %v737 = vld [vmem:[#allocation7 + $0x1a0] sm:$0xff]
    %v738 = vld [vmem:[#allocation7 + $0x1a8] sm:$0xff]
    %v739 = vld [vmem:[#allocation7 + $0x1b0] sm:$0xff]
    %v740 = vld [vmem:[#allocation7 + $0x1b8] sm:$0xff]
    %v741 = vld [vmem:[#allocation7 + $0x1c0] sm:$0xff]
    %v742 = vld [vmem:[#allocation7 + $0x1c8] sm:$0xff]
    %v743 = vld [vmem:[#allocation7 + $0x1d0] sm:$0xff]
    %v744 = vld [vmem:[#allocation7 + $0x1d8] sm:$0xff]
    %v745 = vld [vmem:[#allocation7 + $0x1e0] sm:$0xff]
    %v746 = vld [vmem:[#allocation7 + $0x1e8] sm:$0xff]
    %v747 = vld [vmem:[#allocation7 + $0x1f0] sm:$0xff]
    %v748 = vld [vmem:[#allocation7 + $0x1f8] sm:$0xff]
    %v749 = vld [vmem:[#allocation7 + $0x200] sm:$0xff]
    %v750 = vld [vmem:[#allocation7 + $0x208] sm:$0xff]
    %v751 = vld [vmem:[#allocation7 + $0x210] sm:$0xff]
    %v752 = vld [vmem:[#allocation7 + $0x218] sm:$0xff]
    %v753 = vld [vmem:[#allocation7 + $0x220] sm:$0xff]
    %v754 = vld [vmem:[#allocation7 + $0x228] sm:$0xff]
    %v755 = vld [vmem:[#allocation7 + $0x230] sm:$0xff]
    %v756 = vld [vmem:[#allocation7 + $0x238] sm:$0xff]
    %v757 = vld [vmem:[#allocation7 + $0x240] sm:$0xff]
    %v758 = vld [vmem:[#allocation7 + $0x248] sm:$0xff]
    %v759 = vld [vmem:[#allocation7 + $0x250] sm:$0xff]
    %v760 = vld [vmem:[#allocation7 + $0x258] sm:$0xff]
    %v761 = vld [vmem:[#allocation7 + $0x260] sm:$0xff]
    %v762 = vld [vmem:[#allocation7 + $0x268] sm:$0xff]
    %v763 = vld [vmem:[#allocation7 + $0x270] sm:$0xff]
    %v764 = vld [vmem:[#allocation7 + $0x278] sm:$0xff]
    %v765 = vld [vmem:[#allocation7 + $0x280] sm:$0xff]
    %v766 = vld [vmem:[#allocation7 + $0x288] sm:$0xff]
    %v767 = vld [vmem:[#allocation7 + $0x290] sm:$0xff]
    %v768 = vld [vmem:[#allocation7 + $0x298] sm:$0xff]
    %v769 = vld [vmem:[#allocation7 + $0x2a0] sm:$0xff]
    %v770 = vld [vmem:[#allocation7 + $0x2a8] sm:$0xff]
    %v771 = vld [vmem:[#allocation7 + $0x2b0] sm:$0xff]
    %v772 = vld [vmem:[#allocation7 + $0x2b8] sm:$0xff]
    %v773 = vld [vmem:[#allocation7 + $0x2c0] sm:$0xff]
    %v774 = vld [vmem:[#allocation7 + $0x2c8] sm:$0xff]
    %v775 = vld [vmem:[#allocation7 + $0x2d0] sm:$0xff]
    %v776 = vld [vmem:[#allocation7 + $0x2d8] sm:$0xff]
    %v777 = vld [vmem:[#allocation7 + $0x2e0] sm:$0xff]
    %v778 = vld [vmem:[#allocation7 + $0x2e8] sm:$0xff]
    %v779 = vld [vmem:[#allocation7 + $0x2f0] sm:$0xff]
    %v780 = vld [vmem:[#allocation7 + $0x2f8] sm:$0xff]
    %v781 = vld [vmem:[#allocation7 + $0x300] sm:$0xff]
    %v782 = vld [vmem:[#allocation7 + $0x308] sm:$0xff]
    %v783 = vld [vmem:[#allocation7 + $0x310] sm:$0xff]
    %v784 = vld [vmem:[#allocation7 + $0x318] sm:$0xff]
    %v785 = vld [vmem:[#allocation7 + $0x320] sm:$0xff]
    %v786 = vld [vmem:[#allocation7 + $0x328] sm:$0xff]
    %v787 = vld [vmem:[#allocation7 + $0x330] sm:$0xff]
    %v788 = vld [vmem:[#allocation7 + $0x338] sm:$0xff]
    %v789 = vld [vmem:[#allocation7 + $0x340] sm:$0xff]
    %v790 = vld [vmem:[#allocation7 + $0x348] sm:$0xff]
    %v791 = vld [vmem:[#allocation7 + $0x350] sm:$0xff]
    %v792 = vld [vmem:[#allocation7 + $0x358] sm:$0xff]
    %v793 = vld [vmem:[#allocation7 + $0x360] sm:$0xff]
    %v794 = vld [vmem:[#allocation7 + $0x368] sm:$0xff]
    %v795 = vld [vmem:[#allocation7 + $0x370] sm:$0xff]
    %v796 = vld [vmem:[#allocation7 + $0x378] sm:$0xff]
    %v797 = vld [vmem:[#allocation7 + $0x380] sm:$0xff]
    %v798 = vld [vmem:[#allocation7 + $0x388] sm:$0xff]
    %v799 = vld [vmem:[#allocation7 + $0x390] sm:$0xff]
    %v800 = vld [vmem:[#allocation7 + $0x398] sm:$0xff]
    %v801 = vld [vmem:[#allocation7 + $0x3a0] sm:$0xff]
    %v802 = vld [vmem:[#allocation7 + $0x3a8] sm:$0xff]
    %v803 = vld [vmem:[#allocation7 + $0x3b0] sm:$0xff]
    %v804 = vld [vmem:[#allocation7 + $0x3b8] sm:$0xff]
    %v805 = vld [vmem:[#allocation7 + $0x3c0] sm:$0xff]
    %v806 = vld [vmem:[#allocation7 + $0x3c8] sm:$0xff]
    %v807 = vld [vmem:[#allocation7 + $0x3d0] sm:$0xff]
    %v808 = vld [vmem:[#allocation7 + $0x3d8] sm:$0xff]
    %v809 = vld [vmem:[#allocation7 + $0x3e0] sm:$0xff]
    %v810 = vld [vmem:[#allocation7 + $0x3e8] sm:$0xff]
    %v811 = vld [vmem:[#allocation7 + $0x3f0] sm:$0xff]
    %v812 = vld [vmem:[#allocation7 + $0x3f8] sm:$0xff]
    %v813 = vld [vmem:[%s4] sm:$0x3]
    %v815 = vlaneseq
    %v816 = vshrl.u32 %v815, 7
    %v817 = vsub.s32 0, %v816
    %v818 = vrot.slane %v813, %v817
    %v819 = vlaneseq
    %v820 = vshrl.u32 %v819, 7
    %v821 = vsub.s32 1, %v820
    %v822 = vrot.slane %v813, %v821
    %825 = vmatprep.subr.mxu0 %v686
    %826 = vmatpush1.msra.mxu0 %v685
    %827 = vmatprep.subr.mxu0 %v688
    %828 = vmatpush1.msra.mxu0 %v687
    %829 = vmatprep.subr.mxu0 %v690
    %830 = vmatpush1.msra.mxu0 %v689
    %831 = vmatprep.subr.mxu0 %v692
    %832 = vmatpush1.msra.mxu0 %v691
    %833 = vmatprep.subr.mxu0 %v694
    %834 = vmatpush1.msra.mxu0 %v693
    %835 = vmatprep.subr.mxu0 %v696
    %836 = vmatpush1.msra.mxu0 %v695
    %837 = vmatprep.subr.mxu0 %v698
    %838 = vmatpush1.msra.mxu0 %v697
    %839 = vmatprep.subr.mxu0 %v700
    %840 = vmatpush1.msra.mxu0 %v699
    %841 = vmatprep.subr.mxu0 %v702
    %842 = vmatpush1.msra.mxu0 %v701
    %843 = vmatprep.subr.mxu0 %v704
    %844 = vmatpush1.msra.mxu0 %v703
    %845 = vmatprep.subr.mxu0 %v706
    %846 = vmatpush1.msra.mxu0 %v705
    %847 = vmatprep.subr.mxu0 %v708
    %848 = vmatpush1.msra.mxu0 %v707
    %849 = vmatprep.subr.mxu0 %v710
    %850 = vmatpush1.msra.mxu0 %v709
    %851 = vmatprep.subr.mxu0 %v712
    %852 = vmatpush1.msra.mxu0 %v711
    %853 = vmatprep.subr.mxu0 %v714
    %854 = vmatpush1.msra.mxu0 %v713
    %855 = vmatprep.subr.mxu0 %v716
    %856 = vmatpush1.msra.mxu0 %v715
    %857 = vmatprep.subr.mxu0 %v718
    %858 = vmatpush1.msra.mxu0 %v717
    %859 = vmatprep.subr.mxu0 %v720
    %860 = vmatpush1.msra.mxu0 %v719
    %861 = vmatprep.subr.mxu0 %v722
    %862 = vmatpush1.msra.mxu0 %v721
    %863 = vmatprep.subr.mxu0 %v724
    %864 = vmatpush1.msra.mxu0 %v723
    %865 = vmatprep.subr.mxu0 %v726
    %866 = vmatpush1.msra.mxu0 %v725
    %867 = vmatprep.subr.mxu0 %v728
    %868 = vmatpush1.msra.mxu0 %v727
    %869 = vmatprep.subr.mxu0 %v730
    %870 = vmatpush1.msra.mxu0 %v729
    %871 = vmatprep.subr.mxu0 %v732
    %872 = vmatpush1.msra.mxu0 %v731
    %873 = vmatprep.subr.mxu0 %v734
    %874 = vmatpush1.msra.mxu0 %v733
    %875 = vmatprep.subr.mxu0 %v736
    %876 = vmatpush1.msra.mxu0 %v735
    %877 = vmatprep.subr.mxu0 %v738
    %878 = vmatpush1.msra.mxu0 %v737
    %879 = vmatprep.subr.mxu0 %v740
    %880 = vmatpush1.msra.mxu0 %v739
    %881 = vmatprep.subr.mxu0 %v742
    %882 = vmatpush1.msra.mxu0 %v741
    %883 = vmatprep.subr.mxu0 %v744
    %884 = vmatpush1.msra.mxu0 %v743
    %885 = vmatprep.subr.mxu0 %v746
    %886 = vmatpush1.msra.mxu0 %v745
    %887 = vmatprep.subr.mxu0 %v748
    %888 = vmatpush1.msra.mxu0 %v747
    %889 = vmatprep.mubr.f32.mxu0 %v682
    %890 = vmatmul.mubr.f32.gmra.mrb[0].mxu0 %v681
    %v891 = vpop.f32.mrb[0].mxu0
    %v892 = vadd.f32 %v818, %v891
    %v893 = vpop.f32.mrb[0].mxu0
    %v894 = vadd.f32 %v822, %v893
    %895 = vdwg.mxu0
    %896 = vmatprep.subr.mxu0 %v750
    %897 = vmatpush1.msra.mxu0 %v749
    %898 = vmatprep.subr.mxu0 %v752
    %899 = vmatpush1.msra.mxu0 %v751
    %900 = vmatprep.subr.mxu0 %v754
    %901 = vmatpush1.msra.mxu0 %v753
    %902 = vmatprep.subr.mxu0 %v756
    %903 = vmatpush1.msra.mxu0 %v755
    %904 = vmatprep.subr.mxu0 %v758
    %905 = vmatpush1.msra.mxu0 %v757
    %906 = vmatprep.subr.mxu0 %v760
    %907 = vmatpush1.msra.mxu0 %v759
    %908 = vmatprep.subr.mxu0 %v762
    %909 = vmatpush1.msra.mxu0 %v761
    %910 = vmatprep.subr.mxu0 %v764
    %911 = vmatpush1.msra.mxu0 %v763
    %912 = vmatprep.subr.mxu0 %v766
    %913 = vmatpush1.msra.mxu0 %v765
    %914 = vmatprep.subr.mxu0 %v768
    %915 = vmatpush1.msra.mxu0 %v767
    %916 = vmatprep.subr.mxu0 %v770
    %917 = vmatpush1.msra.mxu0 %v769
    %918 = vmatprep.subr.mxu0 %v772
    %919 = vmatpush1.msra.mxu0 %v771
    %920 = vmatprep.subr.mxu0 %v774
    %921 = vmatpush1.msra.mxu0 %v773
    %922 = vmatprep.subr.mxu0 %v776
    %923 = vmatpush1.msra.mxu0 %v775
    %924 = vmatprep.subr.mxu0 %v778
    %925 = vmatpush1.msra.mxu0 %v777
    %926 = vmatprep.subr.mxu0 %v780
    %927 = vmatpush1.msra.mxu0 %v779
    %928 = vmatprep.subr.mxu0 %v782
    %929 = vmatpush1.msra.mxu0 %v781
    %930 = vmatprep.subr.mxu0 %v784
    %931 = vmatpush1.msra.mxu0 %v783
    %932 = vmatprep.subr.mxu0 %v786
    %933 = vmatpush1.msra.mxu0 %v785
    %934 = vmatprep.subr.mxu0 %v788
    %935 = vmatpush1.msra.mxu0 %v787
    %936 = vmatprep.subr.mxu0 %v790
    %937 = vmatpush1.msra.mxu0 %v789
    %938 = vmatprep.subr.mxu0 %v792
    %939 = vmatpush1.msra.mxu0 %v791
    %940 = vmatprep.subr.mxu0 %v794
    %941 = vmatpush1.msra.mxu0 %v793
    %942 = vmatprep.subr.mxu0 %v796
    %943 = vmatpush1.msra.mxu0 %v795
    %944 = vmatprep.subr.mxu0 %v798
    %945 = vmatpush1.msra.mxu0 %v797
    %946 = vmatprep.subr.mxu0 %v800
    %947 = vmatpush1.msra.mxu0 %v799
    %948 = vmatprep.subr.mxu0 %v802
    %949 = vmatpush1.msra.mxu0 %v801
    %950 = vmatprep.subr.mxu0 %v804
    %951 = vmatpush1.msra.mxu0 %v803
    %952 = vmatprep.subr.mxu0 %v806
    %953 = vmatpush1.msra.mxu0 %v805
    %954 = vmatprep.subr.mxu0 %v808
    %955 = vmatpush1.msra.mxu0 %v807
    %956 = vmatprep.subr.mxu0 %v810
    %957 = vmatpush1.msra.mxu0 %v809
    %958 = vmatprep.subr.mxu0 %v812
    %959 = vmatpush1.msra.mxu0 %v811
    %960 = vmatprep.mubr.f32.mxu0 %v684
    %961 = vmatmul.mubr.f32.gmra.mrb[0].mxu0 %v683
    %v962 = vpop.f32.mrb[0].mxu0
    %v963 = vadd.f32 %v892, %v962
    %v964 = vpop.f32.mrb[0].mxu0
    %v965 = vadd.f32 %v894, %v964
    %966 = vdwg.mxu0
    %v967 = vmax.f32 %v963, 0.0
    %v968 = vmax.f32 %v965, 0.0
    %v969 = vld [vmem:[#allocation8] sm:$0xff]
    %v970 = vld [vmem:[#allocation8 + $0x8] sm:$0xff]
    %v971 = vld [vmem:[#allocation8 + $0x10] sm:$0xff]
    %v972 = vld [vmem:[#allocation8 + $0x18] sm:$0xff]
    %v973 = vld [vmem:[#allocation8 + $0x20] sm:$0xff]
    %v974 = vld [vmem:[#allocation8 + $0x28] sm:$0xff]
    %v975 = vld [vmem:[#allocation8 + $0x30] sm:$0xff]
    %v976 = vld [vmem:[#allocation8 + $0x38] sm:$0xff]
    %v977 = vld [vmem:[#allocation8 + $0x40] sm:$0xff]
    %v978 = vld [vmem:[#allocation8 + $0x48] sm:$0xff]
    %v979 = vld [vmem:[#allocation8 + $0x50] sm:$0xff]
    %v980 = vld [vmem:[#allocation8 + $0x58] sm:$0xff]
    %v981 = vld [vmem:[#allocation8 + $0x60] sm:$0xff]
    %v982 = vld [vmem:[#allocation8 + $0x68] sm:$0xff]
    %v983 = vld [vmem:[#allocation8 + $0x70] sm:$0xff]
    %v984 = vld [vmem:[#allocation8 + $0x78] sm:$0xff]
    %v985 = vld [vmem:[#allocation8 + $0x80] sm:$0xff]
    %v986 = vld [vmem:[#allocation8 + $0x88] sm:$0xff]
    %v987 = vld [vmem:[#allocation8 + $0x90] sm:$0xff]
    %v988 = vld [vmem:[#allocation8 + $0x98] sm:$0xff]
    %v989 = vld [vmem:[#allocation8 + $0xa0] sm:$0xff]
    %v990 = vld [vmem:[#allocation8 + $0xa8] sm:$0xff]
    %v991 = vld [vmem:[#allocation8 + $0xb0] sm:$0xff]
    %v992 = vld [vmem:[#allocation8 + $0xb8] sm:$0xff]
    %v993 = vld [vmem:[#allocation8 + $0xc0] sm:$0xff]
    %v994 = vld [vmem:[#allocation8 + $0xc8] sm:$0xff]
    %v995 = vld [vmem:[#allocation8 + $0xd0] sm:$0xff]
    %v996 = vld [vmem:[#allocation8 + $0xd8] sm:$0xff]
    %v997 = vld [vmem:[#allocation8 + $0xe0] sm:$0xff]
    %v998 = vld [vmem:[#allocation8 + $0xe8] sm:$0xff]
    %v999 = vld [vmem:[#allocation8 + $0xf0] sm:$0xff]
    %v1000 = vld [vmem:[#allocation8 + $0xf8] sm:$0xff]
    %v1001 = vld [vmem:[#allocation8 + $0x100] sm:$0xff]
    %v1002 = vld [vmem:[#allocation8 + $0x108] sm:$0xff]
    %v1003 = vld [vmem:[#allocation8 + $0x110] sm:$0xff]
    %v1004 = vld [vmem:[#allocation8 + $0x118] sm:$0xff]
    %v1005 = vld [vmem:[#allocation8 + $0x120] sm:$0xff]
    %v1006 = vld [vmem:[#allocation8 + $0x128] sm:$0xff]
    %v1007 = vld [vmem:[#allocation8 + $0x130] sm:$0xff]
    %v1008 = vld [vmem:[#allocation8 + $0x138] sm:$0xff]
    %v1009 = vld [vmem:[#allocation8 + $0x140] sm:$0xff]
    %v1010 = vld [vmem:[#allocation8 + $0x148] sm:$0xff]
    %v1011 = vld [vmem:[#allocation8 + $0x150] sm:$0xff]
    %v1012 = vld [vmem:[#allocation8 + $0x158] sm:$0xff]
    %v1013 = vld [vmem:[#allocation8 + $0x160] sm:$0xff]
    %v1014 = vld [vmem:[#allocation8 + $0x168] sm:$0xff]
    %v1015 = vld [vmem:[#allocation8 + $0x170] sm:$0xff]
    %v1016 = vld [vmem:[#allocation8 + $0x178] sm:$0xff]
    %v1017 = vld [vmem:[#allocation8 + $0x180] sm:$0xff]
    %v1018 = vld [vmem:[#allocation8 + $0x188] sm:$0xff]
    %v1019 = vld [vmem:[#allocation8 + $0x190] sm:$0xff]
    %v1020 = vld [vmem:[#allocation8 + $0x198] sm:$0xff]
    %v1021 = vld [vmem:[#allocation8 + $0x1a0] sm:$0xff]
    %v1022 = vld [vmem:[#allocation8 + $0x1a8] sm:$0xff]
    %v1023 = vld [vmem:[#allocation8 + $0x1b0] sm:$0xff]
    %v1024 = vld [vmem:[#allocation8 + $0x1b8] sm:$0xff]
    %v1025 = vld [vmem:[#allocation8 + $0x1c0] sm:$0xff]
    %v1026 = vld [vmem:[#allocation8 + $0x1c8] sm:$0xff]
    %v1027 = vld [vmem:[#allocation8 + $0x1d0] sm:$0xff]
    %v1028 = vld [vmem:[#allocation8 + $0x1d8] sm:$0xff]
    %v1029 = vld [vmem:[#allocation8 + $0x1e0] sm:$0xff]
    %v1030 = vld [vmem:[#allocation8 + $0x1e8] sm:$0xff]
    %v1031 = vld [vmem:[#allocation8 + $0x1f0] sm:$0xff]
    %v1032 = vld [vmem:[#allocation8 + $0x1f8] sm:$0xff]
    %v1033 = vld [vmem:[#allocation8 + $0x200] sm:$0xff]
    %v1034 = vld [vmem:[#allocation8 + $0x208] sm:$0xff]
    %v1035 = vld [vmem:[#allocation8 + $0x210] sm:$0xff]
    %v1036 = vld [vmem:[#allocation8 + $0x218] sm:$0xff]
    %v1037 = vld [vmem:[#allocation8 + $0x220] sm:$0xff]
    %v1038 = vld [vmem:[#allocation8 + $0x228] sm:$0xff]
    %v1039 = vld [vmem:[#allocation8 + $0x230] sm:$0xff]
    %v1040 = vld [vmem:[#allocation8 + $0x238] sm:$0xff]
    %v1041 = vld [vmem:[#allocation8 + $0x240] sm:$0xff]
    %v1042 = vld [vmem:[#allocation8 + $0x248] sm:$0xff]
    %v1043 = vld [vmem:[#allocation8 + $0x250] sm:$0xff]
    %v1044 = vld [vmem:[#allocation8 + $0x258] sm:$0xff]
    %v1045 = vld [vmem:[#allocation8 + $0x260] sm:$0xff]
    %v1046 = vld [vmem:[#allocation8 + $0x268] sm:$0xff]
    %v1047 = vld [vmem:[#allocation8 + $0x270] sm:$0xff]
    %v1048 = vld [vmem:[#allocation8 + $0x278] sm:$0xff]
    %v1049 = vld [vmem:[#allocation8 + $0x280] sm:$0xff]
    %v1050 = vld [vmem:[#allocation8 + $0x288] sm:$0xff]
    %v1051 = vld [vmem:[#allocation8 + $0x290] sm:$0xff]
    %v1052 = vld [vmem:[#allocation8 + $0x298] sm:$0xff]
    %v1053 = vld [vmem:[#allocation8 + $0x2a0] sm:$0xff]
    %v1054 = vld [vmem:[#allocation8 + $0x2a8] sm:$0xff]
    %v1055 = vld [vmem:[#allocation8 + $0x2b0] sm:$0xff]
    %v1056 = vld [vmem:[#allocation8 + $0x2b8] sm:$0xff]
    %v1057 = vld [vmem:[#allocation8 + $0x2c0] sm:$0xff]
    %v1058 = vld [vmem:[#allocation8 + $0x2c8] sm:$0xff]
    %v1059 = vld [vmem:[#allocation8 + $0x2d0] sm:$0xff]
    %v1060 = vld [vmem:[#allocation8 + $0x2d8] sm:$0xff]
    %v1061 = vld [vmem:[#allocation8 + $0x2e0] sm:$0xff]
    %v1062 = vld [vmem:[#allocation8 + $0x2e8] sm:$0xff]
    %v1063 = vld [vmem:[#allocation8 + $0x2f0] sm:$0xff]
    %v1064 = vld [vmem:[#allocation8 + $0x2f8] sm:$0xff]
    %v1065 = vld [vmem:[#allocation8 + $0x300] sm:$0xff]
    %v1066 = vld [vmem:[#allocation8 + $0x308] sm:$0xff]
    %v1067 = vld [vmem:[#allocation8 + $0x310] sm:$0xff]
    %v1068 = vld [vmem:[#allocation8 + $0x318] sm:$0xff]
    %v1069 = vld [vmem:[#allocation8 + $0x320] sm:$0xff]
    %v1070 = vld [vmem:[#allocation8 + $0x328] sm:$0xff]
    %v1071 = vld [vmem:[#allocation8 + $0x330] sm:$0xff]
    %v1072 = vld [vmem:[#allocation8 + $0x338] sm:$0xff]
    %v1073 = vld [vmem:[#allocation8 + $0x340] sm:$0xff]
    %v1074 = vld [vmem:[#allocation8 + $0x348] sm:$0xff]
    %v1075 = vld [vmem:[#allocation8 + $0x350] sm:$0xff]
    %v1076 = vld [vmem:[#allocation8 + $0x358] sm:$0xff]
    %v1077 = vld [vmem:[#allocation8 + $0x360] sm:$0xff]
    %v1078 = vld [vmem:[#allocation8 + $0x368] sm:$0xff]
    %v1079 = vld [vmem:[#allocation8 + $0x370] sm:$0xff]
    %v1080 = vld [vmem:[#allocation8 + $0x378] sm:$0xff]
    %v1081 = vld [vmem:[#allocation8 + $0x380] sm:$0xff]
    %v1082 = vld [vmem:[#allocation8 + $0x388] sm:$0xff]
    %v1083 = vld [vmem:[#allocation8 + $0x390] sm:$0xff]
    %v1084 = vld [vmem:[#allocation8 + $0x398] sm:$0xff]
    %v1085 = vld [vmem:[#allocation8 + $0x3a0] sm:$0xff]
    %v1086 = vld [vmem:[#allocation8 + $0x3a8] sm:$0xff]
    %v1087 = vld [vmem:[#allocation8 + $0x3b0] sm:$0xff]
    %v1088 = vld [vmem:[#allocation8 + $0x3b8] sm:$0xff]
    %v1089 = vld [vmem:[#allocation8 + $0x3c0] sm:$0xff]
    %v1090 = vld [vmem:[#allocation8 + $0x3c8] sm:$0xff]
    %v1091 = vld [vmem:[#allocation8 + $0x3d0] sm:$0xff]
    %v1092 = vld [vmem:[#allocation8 + $0x3d8] sm:$0xff]
    %v1093 = vld [vmem:[#allocation8 + $0x3e0] sm:$0xff]
    %v1094 = vld [vmem:[#allocation8 + $0x3e8] sm:$0xff]
    %v1095 = vld [vmem:[#allocation8 + $0x3f0] sm:$0xff]
    %v1096 = vld [vmem:[#allocation8 + $0x3f8] sm:$0xff]
    %v1097 = vld [vmem:[#allocation10] sm:$0x3]
    %v1099 = vlaneseq
    %v1100 = vshrl.u32 %v1099, 7
    %v1101 = vsub.s32 0, %v1100
    %v1102 = vrot.slane %v1097, %v1101
    %v1103 = vlaneseq
    %v1104 = vshrl.u32 %v1103, 7
    %v1105 = vsub.s32 1, %v1104
    %v1106 = vrot.slane %v1097, %v1105
    %1109 = vmatprep.subr.mxu0 %v970
    %1110 = vmatpush1.msra.mxu0 %v969
    %1111 = vmatprep.subr.mxu0 %v972
    %1112 = vmatpush1.msra.mxu0 %v971
    %1113 = vmatprep.subr.mxu0 %v974
    %1114 = vmatpush1.msra.mxu0 %v973
    %1115 = vmatprep.subr.mxu0 %v976
    %1116 = vmatpush1.msra.mxu0 %v975
    %1117 = vmatprep.subr.mxu0 %v978
    %1118 = vmatpush1.msra.mxu0 %v977
    %1119 = vmatprep.subr.mxu0 %v980
    %1120 = vmatpush1.msra.mxu0 %v979
    %1121 = vmatprep.subr.mxu0 %v982
    %1122 = vmatpush1.msra.mxu0 %v981
    %1123 = vmatprep.subr.mxu0 %v984
    %1124 = vmatpush1.msra.mxu0 %v983
    %1125 = vmatprep.subr.mxu0 %v986
    %1126 = vmatpush1.msra.mxu0 %v985
    %1127 = vmatprep.subr.mxu0 %v988
    %1128 = vmatpush1.msra.mxu0 %v987
    %1129 = vmatprep.subr.mxu0 %v990
    %1130 = vmatpush1.msra.mxu0 %v989
    %1131 = vmatprep.subr.mxu0 %v992
    %1132 = vmatpush1.msra.mxu0 %v991
    %1133 = vmatprep.subr.mxu0 %v994
    %1134 = vmatpush1.msra.mxu0 %v993
    %1135 = vmatprep.subr.mxu0 %v996
    %1136 = vmatpush1.msra.mxu0 %v995
    %1137 = vmatprep.subr.mxu0 %v998
    %1138 = vmatpush1.msra.mxu0 %v997
    %1139 = vmatprep.subr.mxu0 %v1000
    %1140 = vmatpush1.msra.mxu0 %v999
    %1141 = vmatprep.subr.mxu0 %v1002
    %1142 = vmatpush1.msra.mxu0 %v1001
    %1143 = vmatprep.subr.mxu0 %v1004
    %1144 = vmatpush1.msra.mxu0 %v1003
    %1145 = vmatprep.subr.mxu0 %v1006
    %1146 = vmatpush1.msra.mxu0 %v1005
    %1147 = vmatprep.subr.mxu0 %v1008
    %1148 = vmatpush1.msra.mxu0 %v1007
    %1149 = vmatprep.subr.mxu0 %v1010
    %1150 = vmatpush1.msra.mxu0 %v1009
    %1151 = vmatprep.subr.mxu0 %v1012
    %1152 = vmatpush1.msra.mxu0 %v1011
    %1153 = vmatprep.subr.mxu0 %v1014
    %1154 = vmatpush1.msra.mxu0 %v1013
    %1155 = vmatprep.subr.mxu0 %v1016
    %1156 = vmatpush1.msra.mxu0 %v1015
    %1157 = vmatprep.subr.mxu0 %v1018
    %1158 = vmatpush1.msra.mxu0 %v1017
    %1159 = vmatprep.subr.mxu0 %v1020
    %1160 = vmatpush1.msra.mxu0 %v1019
    %1161 = vmatprep.subr.mxu0 %v1022
    %1162 = vmatpush1.msra.mxu0 %v1021
    %1163 = vmatprep.subr.mxu0 %v1024
    %1164 = vmatpush1.msra.mxu0 %v1023
    %1165 = vmatprep.subr.mxu0 %v1026
    %1166 = vmatpush1.msra.mxu0 %v1025
    %1167 = vmatprep.subr.mxu0 %v1028
    %1168 = vmatpush1.msra.mxu0 %v1027
    %1169 = vmatprep.subr.mxu0 %v1030
    %1170 = vmatpush1.msra.mxu0 %v1029
    %1171 = vmatprep.subr.mxu0 %v1032
    %1172 = vmatpush1.msra.mxu0 %v1031
    %1173 = vmatprep.mubr.f32.mxu0 %v116
    %1174 = vmatmul.mubr.f32.gmra.mrb[0].mxu0 %v115
    %v1175 = vpop.f32.mrb[0].mxu0
    %v1176 = vadd.f32 %v1102, %v1175
    %v1177 = vpop.f32.mrb[0].mxu0
    %v1178 = vadd.f32 %v1106, %v1177
    %1179 = vdwg.mxu0
    %1180 = vmatprep.subr.mxu0 %v1034
    %1181 = vmatpush1.msra.mxu0 %v1033
    %1182 = vmatprep.subr.mxu0 %v1036
    %1183 = vmatpush1.msra.mxu0 %v1035
    %1184 = vmatprep.subr.mxu0 %v1038
    %1185 = vmatpush1.msra.mxu0 %v1037
    %1186 = vmatprep.subr.mxu0 %v1040
    %1187 = vmatpush1.msra.mxu0 %v1039
    %1188 = vmatprep.subr.mxu0 %v1042
    %1189 = vmatpush1.msra.mxu0 %v1041
    %1190 = vmatprep.subr.mxu0 %v1044
    %1191 = vmatpush1.msra.mxu0 %v1043
    %1192 = vmatprep.subr.mxu0 %v1046
    %1193 = vmatpush1.msra.mxu0 %v1045
    %1194 = vmatprep.subr.mxu0 %v1048
    %1195 = vmatpush1.msra.mxu0 %v1047
    %1196 = vmatprep.subr.mxu0 %v1050
    %1197 = vmatpush1.msra.mxu0 %v1049
    %1198 = vmatprep.subr.mxu0 %v1052
    %1199 = vmatpush1.msra.mxu0 %v1051
    %1200 = vmatprep.subr.mxu0 %v1054
    %1201 = vmatpush1.msra.mxu0 %v1053
    %1202 = vmatprep.subr.mxu0 %v1056
    %1203 = vmatpush1.msra.mxu0 %v1055
    %1204 = vmatprep.subr.mxu0 %v1058
    %1205 = vmatpush1.msra.mxu0 %v1057
    %1206 = vmatprep.subr.mxu0 %v1060
    %1207 = vmatpush1.msra.mxu0 %v1059
    %1208 = vmatprep.subr.mxu0 %v1062
    %1209 = vmatpush1.msra.mxu0 %v1061
    %1210 = vmatprep.subr.mxu0 %v1064
    %1211 = vmatpush1.msra.mxu0 %v1063
    %1212 = vmatprep.subr.mxu0 %v1066
    %1213 = vmatpush1.msra.mxu0 %v1065
    %1214 = vmatprep.subr.mxu0 %v1068
    %1215 = vmatpush1.msra.mxu0 %v1067
    %1216 = vmatprep.subr.mxu0 %v1070
    %1217 = vmatpush1.msra.mxu0 %v1069
    %1218 = vmatprep.subr.mxu0 %v1072
    %1219 = vmatpush1.msra.mxu0 %v1071
    %1220 = vmatprep.subr.mxu0 %v1074
    %1221 = vmatpush1.msra.mxu0 %v1073
    %1222 = vmatprep.subr.mxu0 %v1076
    %1223 = vmatpush1.msra.mxu0 %v1075
    %1224 = vmatprep.subr.mxu0 %v1078
    %1225 = vmatpush1.msra.mxu0 %v1077
    %1226 = vmatprep.subr.mxu0 %v1080
    %1227 = vmatpush1.msra.mxu0 %v1079
    %1228 = vmatprep.subr.mxu0 %v1082
    %1229 = vmatpush1.msra.mxu0 %v1081
    %1230 = vmatprep.subr.mxu0 %v1084
    %1231 = vmatpush1.msra.mxu0 %v1083
    %1232 = vmatprep.subr.mxu0 %v1086
    %1233 = vmatpush1.msra.mxu0 %v1085
    %1234 = vmatprep.subr.mxu0 %v1088
    %1235 = vmatpush1.msra.mxu0 %v1087
    %1236 = vmatprep.subr.mxu0 %v1090
    %1237 = vmatpush1.msra.mxu0 %v1089
    %1238 = vmatprep.subr.mxu0 %v1092
    %1239 = vmatpush1.msra.mxu0 %v1091
    %1240 = vmatprep.subr.mxu0 %v1094
    %1241 = vmatpush1.msra.mxu0 %v1093
    %1242 = vmatprep.subr.mxu0 %v1096
    %1243 = vmatpush1.msra.mxu0 %v1095
    %1244 = vmatprep.mubr.f32.mxu0 %v118
    %1245 = vmatmul.mubr.f32.gmra.mrb[0].mxu0 %v117
    %v1246 = vpop.f32.mrb[0].mxu0
    %v1247 = vadd.f32 %v1176, %v1246
    %v1248 = vpop.f32.mrb[0].mxu0
    %v1249 = vadd.f32 %v1178, %v1248
    %1250 = vdwg.mxu0
    %v1251 = vmax.f32 %v1247, 0.0
    %v1252 = vmax.f32 %v1249, 0.0
    %v1253 = vld [vmem:[#allocation11] sm:$0xff]
    %v1254 = vld [vmem:[#allocation11 + $0x8] sm:$0xff]
    %v1255 = vld [vmem:[#allocation11 + $0x10] sm:$0xff]
    %v1256 = vld [vmem:[#allocation11 + $0x18] sm:$0xff]
    %v1257 = vld [vmem:[#allocation11 + $0x20] sm:$0xff]
    %v1258 = vld [vmem:[#allocation11 + $0x28] sm:$0xff]
    %v1259 = vld [vmem:[#allocation11 + $0x30] sm:$0xff]
    %v1260 = vld [vmem:[#allocation11 + $0x38] sm:$0xff]
    %v1261 = vld [vmem:[#allocation11 + $0x40] sm:$0xff]
    %v1262 = vld [vmem:[#allocation11 + $0x48] sm:$0xff]
    %v1263 = vld [vmem:[#allocation11 + $0x50] sm:$0xff]
    %v1264 = vld [vmem:[#allocation11 + $0x58] sm:$0xff]
    %v1265 = vld [vmem:[#allocation11 + $0x60] sm:$0xff]
    %v1266 = vld [vmem:[#allocation11 + $0x68] sm:$0xff]
    %v1267 = vld [vmem:[#allocation11 + $0x70] sm:$0xff]
    %v1268 = vld [vmem:[#allocation11 + $0x78] sm:$0xff]
    %v1269 = vld [vmem:[#allocation11 + $0x80] sm:$0xff]
    %v1270 = vld [vmem:[#allocation11 + $0x88] sm:$0xff]
    %v1271 = vld [vmem:[#allocation11 + $0x90] sm:$0xff]
    %v1272 = vld [vmem:[#allocation11 + $0x98] sm:$0xff]
    %v1273 = vld [vmem:[#allocation11 + $0xa0] sm:$0xff]
    %v1274 = vld [vmem:[#allocation11 + $0xa8] sm:$0xff]
    %v1275 = vld [vmem:[#allocation11 + $0xb0] sm:$0xff]
    %v1276 = vld [vmem:[#allocation11 + $0xb8] sm:$0xff]
    %v1277 = vld [vmem:[#allocation11 + $0xc0] sm:$0xff]
    %v1278 = vld [vmem:[#allocation11 + $0xc8] sm:$0xff]
    %v1279 = vld [vmem:[#allocation11 + $0xd0] sm:$0xff]
    %v1280 = vld [vmem:[#allocation11 + $0xd8] sm:$0xff]
    %v1281 = vld [vmem:[#allocation11 + $0xe0] sm:$0xff]
    %v1282 = vld [vmem:[#allocation11 + $0xe8] sm:$0xff]
    %v1283 = vld [vmem:[#allocation11 + $0xf0] sm:$0xff]
    %v1284 = vld [vmem:[#allocation11 + $0xf8] sm:$0xff]
    %v1285 = vld [vmem:[#allocation11 + $0x100] sm:$0xff]
    %v1286 = vld [vmem:[#allocation11 + $0x108] sm:$0xff]
    %v1287 = vld [vmem:[#allocation11 + $0x110] sm:$0xff]
    %v1288 = vld [vmem:[#allocation11 + $0x118] sm:$0xff]
    %v1289 = vld [vmem:[#allocation11 + $0x120] sm:$0xff]
    %v1290 = vld [vmem:[#allocation11 + $0x128] sm:$0xff]
    %v1291 = vld [vmem:[#allocation11 + $0x130] sm:$0xff]
    %v1292 = vld [vmem:[#allocation11 + $0x138] sm:$0xff]
    %v1293 = vld [vmem:[#allocation11 + $0x140] sm:$0xff]
    %v1294 = vld [vmem:[#allocation11 + $0x148] sm:$0xff]
    %v1295 = vld [vmem:[#allocation11 + $0x150] sm:$0xff]
    %v1296 = vld [vmem:[#allocation11 + $0x158] sm:$0xff]
    %v1297 = vld [vmem:[#allocation11 + $0x160] sm:$0xff]
    %v1298 = vld [vmem:[#allocation11 + $0x168] sm:$0xff]
    %v1299 = vld [vmem:[#allocation11 + $0x170] sm:$0xff]
    %v1300 = vld [vmem:[#allocation11 + $0x178] sm:$0xff]
    %v1301 = vld [vmem:[#allocation11 + $0x180] sm:$0xff]
    %v1302 = vld [vmem:[#allocation11 + $0x188] sm:$0xff]
    %v1303 = vld [vmem:[#allocation11 + $0x190] sm:$0xff]
    %v1304 = vld [vmem:[#allocation11 + $0x198] sm:$0xff]
    %v1305 = vld [vmem:[#allocation11 + $0x1a0] sm:$0xff]
    %v1306 = vld [vmem:[#allocation11 + $0x1a8] sm:$0xff]
    %v1307 = vld [vmem:[#allocation11 + $0x1b0] sm:$0xff]
    %v1308 = vld [vmem:[#allocation11 + $0x1b8] sm:$0xff]
    %v1309 = vld [vmem:[#allocation11 + $0x1c0] sm:$0xff]
    %v1310 = vld [vmem:[#allocation11 + $0x1c8] sm:$0xff]
    %v1311 = vld [vmem:[#allocation11 + $0x1d0] sm:$0xff]
    %v1312 = vld [vmem:[#allocation11 + $0x1d8] sm:$0xff]
    %v1313 = vld [vmem:[#allocation11 + $0x1e0] sm:$0xff]
    %v1314 = vld [vmem:[#allocation11 + $0x1e8] sm:$0xff]
    %v1315 = vld [vmem:[#allocation11 + $0x1f0] sm:$0xff]
    %v1316 = vld [vmem:[#allocation11 + $0x1f8] sm:$0xff]
    %v1317 = vld [vmem:[%s8] sm:$0x3]
    %v1319 = vlaneseq
    %v1320 = vshrl.u32 %v1319, 7
    %v1321 = vsub.s32 0, %v1320
    %v1322 = vrot.slane %v1317, %v1321
    %v1323 = vlaneseq
    %v1324 = vshrl.u32 %v1323, 7
    %v1325 = vsub.s32 1, %v1324
    %v1326 = vrot.slane %v1317, %v1325
    %1329 = vmatprep.subr.mxu0 %v1254
    %1330 = vmatpush1.msra.mxu0 %v1253
    %1331 = vmatprep.subr.mxu0 %v1256
    %1332 = vmatpush1.msra.mxu0 %v1255
    %1333 = vmatprep.subr.mxu0 %v1258
    %1334 = vmatpush1.msra.mxu0 %v1257
    %1335 = vmatprep.subr.mxu0 %v1260
    %1336 = vmatpush1.msra.mxu0 %v1259
    %1337 = vmatprep.subr.mxu0 %v1262
    %1338 = vmatpush1.msra.mxu0 %v1261
    %1339 = vmatprep.subr.mxu0 %v1264
    %1340 = vmatpush1.msra.mxu0 %v1263
    %1341 = vmatprep.subr.mxu0 %v1266
    %1342 = vmatpush1.msra.mxu0 %v1265
    %1343 = vmatprep.subr.mxu0 %v1268
    %1344 = vmatpush1.msra.mxu0 %v1267
    %1345 = vmatprep.subr.mxu0 %v1270
    %1346 = vmatpush1.msra.mxu0 %v1269
    %1347 = vmatprep.subr.mxu0 %v1272
    %1348 = vmatpush1.msra.mxu0 %v1271
    %1349 = vmatprep.subr.mxu0 %v1274
    %1350 = vmatpush1.msra.mxu0 %v1273
    %1351 = vmatprep.subr.mxu0 %v1276
    %1352 = vmatpush1.msra.mxu0 %v1275
    %1353 = vmatprep.subr.mxu0 %v1278
    %1354 = vmatpush1.msra.mxu0 %v1277
    %1355 = vmatprep.subr.mxu0 %v1280
    %1356 = vmatpush1.msra.mxu0 %v1279
    %1357 = vmatprep.subr.mxu0 %v1282
    %1358 = vmatpush1.msra.mxu0 %v1281
    %1359 = vmatprep.subr.mxu0 %v1284
    %1360 = vmatpush1.msra.mxu0 %v1283
    %1361 = vmatprep.subr.mxu0 %v1286
    %1362 = vmatpush1.msra.mxu0 %v1285
    %1363 = vmatprep.subr.mxu0 %v1288
    %1364 = vmatpush1.msra.mxu0 %v1287
    %1365 = vmatprep.subr.mxu0 %v1290
    %1366 = vmatpush1.msra.mxu0 %v1289
    %1367 = vmatprep.subr.mxu0 %v1292
    %1368 = vmatpush1.msra.mxu0 %v1291
    %1369 = vmatprep.subr.mxu0 %v1294
    %1370 = vmatpush1.msra.mxu0 %v1293
    %1371 = vmatprep.subr.mxu0 %v1296
    %1372 = vmatpush1.msra.mxu0 %v1295
    %1373 = vmatprep.subr.mxu0 %v1298
    %1374 = vmatpush1.msra.mxu0 %v1297
    %1375 = vmatprep.subr.mxu0 %v1300
    %1376 = vmatpush1.msra.mxu0 %v1299
    %1377 = vmatprep.subr.mxu0 %v1302
    %1378 = vmatpush1.msra.mxu0 %v1301
    %1379 = vmatprep.subr.mxu0 %v1304
    %1380 = vmatpush1.msra.mxu0 %v1303
    %1381 = vmatprep.subr.mxu0 %v1306
    %1382 = vmatpush1.msra.mxu0 %v1305
    %1383 = vmatprep.subr.mxu0 %v1308
    %1384 = vmatpush1.msra.mxu0 %v1307
    %1385 = vmatprep.subr.mxu0 %v1310
    %1386 = vmatpush1.msra.mxu0 %v1309
    %1387 = vmatprep.subr.mxu0 %v1312
    %1388 = vmatpush1.msra.mxu0 %v1311
    %1389 = vmatprep.subr.mxu0 %v1314
    %1390 = vmatpush1.msra.mxu0 %v1313
    %1391 = vmatprep.subr.mxu0 %v1316
    %1392 = vmatpush1.msra.mxu0 %v1315
    %1393 = vmatprep.mubr.f32.mxu0 %v1252
    %1394 = vmatmul.mubr.f32.gmra.mrb[0].mxu0 %v1251
    %v1395 = vpop.f32.mrb[0].mxu0
    %v1396 = vadd.f32 %v1322, %v1395
    %v1397 = vpop.f32.mrb[0].mxu0
    %v1398 = vadd.f32 %v1326, %v1397
    %1399 = vdwg.mxu0
    %v1400 = vmax.f32 %v1396, 0.0
    %v1401 = vmax.f32 %v1398, 0.0
    %v1402 = vadd.f32 %v967, %v1400
    %v1403 = vadd.f32 %v968, %v1401
    %1404 = vst [vmem:[#allocation13] sm:$0xff] %v1402
    %1405 = vst [vmem:[#allocation13 + $0x8] sm:$0xff] %v1403
    // Predicated region
    $region62: #{_forward.1} parent=1 // pred_check
      _
    $region63: #{_forward.1} parent=1 // pred_check_branch
      %1407 = sbr.rel (0) target = $region65
    $region64: #{_forward.1} parent=1 // pred_region
      %s1409 = ssub.s32 256, 256
      %1410 = vsyncadd [#allocation4], %s1409
      %s1412 = sshll.u32 [#allocation13], 4
      %s1413 = int_to_ptr.vmem [resolvable:$true] %s1412
      %1415 = dma.vmem_to_hbm [thread:$0]  %s1413, 256, %s9, [#allocation4]
    $region65: #{_forward.1} parent=1 // pred_fallthru
      _
    // Predicated region
    $region66: #{_forward.1} parent=1 // pred_check
      _
    $region67: #{_forward.1} parent=1 // pred_check_branch
      %1417 = sbr.rel (0) target = $region69
    $region68: #{_forward.1} parent=1 // pred_region
      %1418 = dma.done [#allocation4], 256
    $region69: #{_forward.1} parent=1 // pred_fallthru
      _
    %1419 = vsyncpa [#allocation3], 1
    %1420 = vsyncpa [#allocation6], 1
    %1421 = vsyncpa [#allocation9], 1
    %1422 = vsyncpa [#allocation12], 1
    %1423 = vsyncpa [#allocation4], 1

</llo_original>
